<compile_context>
chip_gen: v7x
topology: tpu7x:2x2x1
jax: 0.10.0
libtpu: 0.0.40
codegen_flags: <defaults>
</compile_context>

<pallas_src>
import functools

import jax
import jax.numpy as jnp
from jax.experimental import pallas as pl
from jax.experimental.pallas import tpu as pltpu

NEG_SLOPE = 0.01  # nn.LeakyReLU default


# (in, out) sizes of the 8 Linear layers, parameterized on size_first_layer.
def _layer_dims(size_first_layer):
    return [
        (size_first_layer, 32),
        (32, 64),
        (64, 64),
        (64, 128),
        (128, 64),
        (64, 64),
        (64, 16),
        (16, 1),
    ]


def flash_kernel(x_ref, *refs):
    """refs = (w1, b1, ..., w8, b8, o_ref).

    Layout: activations are (features, batch_tile), weights are PyTorch-layout
    (out_features, in_features), biases are (out_features, 1).  Each layer is
    h_next = W @ h + b, so the batch dimension stays in lanes throughout and the
    final (1, batch_tile) result is stored lane-dense.
    """
    o_ref = refs[-1]
    params = refs[:-1]

    h = x_ref[...]  # (F, bt) bf16
    # Layers 1..7: Linear -> (Dropout == identity in eval) -> LeakyReLU
    for li in range(7):
        w = params[2 * li][...]          # (out, in)  bf16
        b = params[2 * li + 1][...]      # (out, 1)   f32
        z = jnp.dot(w, h, preferred_element_type=jnp.float32) + b   # (out, bt) f32
        a = jnp.where(z > 0, z, NEG_SLOPE * z)                      # LeakyReLU in f32
        h = a.astype(jnp.bfloat16) if li < 6 else a                 # bf16 feed for MXU

    # Final layer: Linear(16, 1) -> Sigmoid.  Output row is lane-dense (1, bt):
    # full lane utilization on the store (no masked vst.msk partial stores).
    w8 = params[14][...]                 # (1, 16) f32
    b8 = params[15][...]                 # (1, 1)  f32
    z = jnp.dot(w8, h, preferred_element_type=jnp.float32) + b8     # (1, bt) f32
    out = pl.reciprocal(1.0 + jnp.exp(-z), approx=True)             # sigmoid via EUP
    o_ref[...] = out.astype(o_ref.dtype)


def make_flash_params(size_first_layer, key):
    """Deterministic parameter init in PyTorch layout: W is (out, in), b is (out,)."""
    dims = _layer_dims(size_first_layer)
    params = []
    for (fan_in, fan_out) in dims:
        key, kw, kb = jax.random.split(key, 3)
        scale = 1.0 / jnp.sqrt(jnp.float32(fan_in))
        w = jax.random.normal(kw, (fan_out, fan_in), dtype=jnp.float32) * scale
        b = jax.random.normal(kb, (fan_out,), dtype=jnp.float32) * scale
        params.append(w)
        params.append(b)
    return params


def _pick_batch_tile(B, max_tile=2048, align=256):
    # Lane-aligned (128) and MXU-friendly (256 on v6e/v7x, covers v5e's 128).
    # Keep >= 2 grid steps when the batch is big enough so both v7x TensorCores
    # get a share of the parallel grid axis.
    if B >= 4 * align:
        return min(max_tile, ((B // 2) // align) * align)
    return align


@functools.partial(jax.jit, static_argnames=("batch_tile",))
def flash_forward(x, params, batch_tile=None):
    B, F = x.shape
    if batch_tile is None:
        batch_tile = _pick_batch_tile(B)
    assert batch_tile % 128 == 0
    n_tiles = pl.cdiv(B, batch_tile)
    B_pad = n_tiles * batch_tile

    # Feature-major layout, lane-dense over batch; bf16 feed for the MXU.
    x_t = jnp.transpose(x).astype(jnp.bfloat16)          # (F, B)
    if B_pad != B:
        x_t = jnp.pad(x_t, ((0, 0), (0, B_pad - B)))

    # Kernel-layout params: first 7 weights in bf16 (MXU), last in f32; biases (out, 1) f32.
    kparams = []
    for li in range(8):
        W = params[2 * li]
        b = params[2 * li + 1]
        w_dtype = jnp.bfloat16 if li < 7 else jnp.float32
        kparams.append(W.astype(w_dtype))
        kparams.append(b.reshape(-1, 1).astype(jnp.float32))

    # x: tiled over batch (lanes). Weights/biases: full-array blocks with a
    # constant index_map -> Pallas keeps them resident in VMEM (no per-step DMA).
    in_specs = [pl.BlockSpec((F, batch_tile), lambda i: (0, i))]
    for p in kparams:
        in_specs.append(pl.BlockSpec(p.shape, lambda i: (0, 0)))

    out_spec = pl.BlockSpec((1, batch_tile), lambda i: (0, i))

    dims = _layer_dims(F)
    flops = 2 * sum(fi * fo for (fi, fo) in dims) * B_pad
    param_bytes = sum(int(p.size) * p.dtype.itemsize for p in kparams)
    cost = pl.CostEstimate(
        flops=int(flops),
        transcendentals=int(B_pad),
        bytes_accessed=int(x_t.size * 2 + B_pad * 4 + param_bytes),
    )

    out = pl.pallas_call(
        flash_kernel,
        out_shape=jax.ShapeDtypeStruct((1, B_pad), jnp.float32),
        grid_spec=pltpu.PrefetchScalarGridSpec(
            num_scalar_prefetch=0,
            grid=(n_tiles,),
            in_specs=in_specs,
            out_specs=out_spec,
        ),
        compiler_params=pltpu.CompilerParams(
            dimension_semantics=("parallel",),
        ),
        cost_estimate=cost,
    )(x_t, *kparams)

    return out[0, :B].reshape(B, 1)


def flash_reference(x, params):
    """Plain-JAX reference matching the kernel's numerics (bf16 MXU, f32 math)."""
    h = x.astype(jnp.float32)
    for li in range(7):
        W = params[2 * li].astype(jnp.bfloat16)
        b = params[2 * li + 1]
        z = jnp.dot(h.astype(jnp.bfloat16), W.T,
                    preferred_element_type=jnp.float32) + b
        h = jnp.where(z > 0, z, NEG_SLOPE * z)
    z = h @ params[14].T + params[15]
    return jax.nn.sigmoid(z)


if __name__ == "__main__":
    size_first_layer = 32
    batch = 16

    key = jax.random.PRNGKey(0)
    key, kx = jax.random.split(key)
    x = jax.random.normal(kx, (batch, size_first_layer), dtype=jnp.float32)

    params = make_flash_params(size_first_layer, key)

    out = flash_forward(x, params)
    out = jax.block_until_ready(out)

    ref = flash_reference(x, params)
    assert out.shape == (batch, 1)
    # bf16 matmul inputs + approx-reciprocal sigmoid -> compare with a loose-but-
    # meaningful tolerance (outputs live in (0, 1)).
    assert jnp.allclose(out, ref, atol=1e-2, rtol=1e-2), "mismatch vs reference"

    print("KERNEL_OK")
</pallas_src>

<mosaic_0001>
module attributes {stable_mosaic.version = 11 : i64} {
  func.func @flash_kernel(%arg0: i32, %arg1: memref<32x256xbf16, #tpu.memory_space<vmem>>, %arg2: memref<32x32xbf16, #tpu.memory_space<vmem>>, %arg3: memref<32x1xf32, #tpu.memory_space<vmem>>, %arg4: memref<64x32xbf16, #tpu.memory_space<vmem>>, %arg5: memref<64x1xf32, #tpu.memory_space<vmem>>, %arg6: memref<64x64xbf16, #tpu.memory_space<vmem>>, %arg7: memref<64x1xf32, #tpu.memory_space<vmem>>, %arg8: memref<128x64xbf16, #tpu.memory_space<vmem>>, %arg9: memref<128x1xf32, #tpu.memory_space<vmem>>, %arg10: memref<64x128xbf16, #tpu.memory_space<vmem>>, %arg11: memref<64x1xf32, #tpu.memory_space<vmem>>, %arg12: memref<64x64xbf16, #tpu.memory_space<vmem>>, %arg13: memref<64x1xf32, #tpu.memory_space<vmem>>, %arg14: memref<16x64xbf16, #tpu.memory_space<vmem>>, %arg15: memref<16x1xf32, #tpu.memory_space<vmem>>, %arg16: memref<1x16xf32, #tpu.memory_space<vmem>>, %arg17: memref<1x1xf32, #tpu.memory_space<vmem>>, %arg18: memref<1x256xf32, #tpu.memory_space<vmem>>) attributes {dimension_semantics = [#tpu.dimension_semantics<parallel>], iteration_bounds = array<i64: 1>, scalar_prefetch = 0 : i64, scratch_operands = 0 : i64, tpu.core_type = #tpu.core_type<tc>, window_params = [{transform_indices = @transform_0, window_bounds = array<i64: 32, 256>}, {pipeline_mode = #tpu.pipeline_mode<synchronous>, transform_indices = @transform_1, window_bounds = array<i64: 32, 32>}, {pipeline_mode = #tpu.pipeline_mode<synchronous>, transform_indices = @transform_2, window_bounds = array<i64: 32, 1>}, {pipeline_mode = #tpu.pipeline_mode<synchronous>, transform_indices = @transform_3, window_bounds = array<i64: 64, 32>}, {pipeline_mode = #tpu.pipeline_mode<synchronous>, transform_indices = @transform_4, window_bounds = array<i64: 64, 1>}, {pipeline_mode = #tpu.pipeline_mode<synchronous>, transform_indices = @transform_5, window_bounds = array<i64: 64, 64>}, {pipeline_mode = #tpu.pipeline_mode<synchronous>, transform_indices = @transform_6, window_bounds = array<i64: 64, 1>}, {pipeline_mode = #tpu.pipeline_mode<synchronous>, transform_indices = @transform_7, window_bounds = array<i64: 128, 64>}, {pipeline_mode = #tpu.pipeline_mode<synchronous>, transform_indices = @transform_8, window_bounds = array<i64: 128, 1>}, {pipeline_mode = #tpu.pipeline_mode<synchronous>, transform_indices = @transform_9, window_bounds = array<i64: 64, 128>}, {pipeline_mode = #tpu.pipeline_mode<synchronous>, transform_indices = @transform_10, window_bounds = array<i64: 64, 1>}, {pipeline_mode = #tpu.pipeline_mode<synchronous>, transform_indices = @transform_11, window_bounds = array<i64: 64, 64>}, {pipeline_mode = #tpu.pipeline_mode<synchronous>, transform_indices = @transform_12, window_bounds = array<i64: 64, 1>}, {pipeline_mode = #tpu.pipeline_mode<synchronous>, transform_indices = @transform_13, window_bounds = array<i64: 16, 64>}, {pipeline_mode = #tpu.pipeline_mode<synchronous>, transform_indices = @transform_14, window_bounds = array<i64: 16, 1>}, {pipeline_mode = #tpu.pipeline_mode<synchronous>, transform_indices = @transform_15, window_bounds = array<i64: 1, 16>}, {pipeline_mode = #tpu.pipeline_mode<synchronous>, transform_indices = @transform_16, window_bounds = array<i64: 1, 1>}, {transform_indices = @transform_17, window_bounds = array<i64: 1, 256>}]} {
    %c0 = arith.constant 0 : index
    %c0_0 = arith.constant 0 : index
    %0 = vector.load %arg1[%c0, %c0_0] : memref<32x256xbf16, #tpu.memory_space<vmem>>, vector<32x256xbf16>
    %c0_1 = arith.constant 0 : index
    %c0_2 = arith.constant 0 : index
    %1 = vector.load %arg2[%c0_1, %c0_2] : memref<32x32xbf16, #tpu.memory_space<vmem>>, vector<32x32xbf16>
    %c0_3 = arith.constant 0 : index
    %c0_4 = arith.constant 0 : index
    %2 = vector.load %arg3[%c0_3, %c0_4] : memref<32x1xf32, #tpu.memory_space<vmem>>, vector<32x1xf32>
    %cst = arith.constant dense<0.000000e+00> : vector<32x256xf32>
    %3 = tpu.matmul %1, %0, %cst {dimension_numbers = #tpu.dot_dimension_numbers<[1], [0], [0], [1], [0, 0, 1, 1], [], []>} : vector<32x32xbf16>, vector<32x256xbf16>, vector<32x256xf32> -> vector<32x256xf32>
    %4 = vector.broadcast %2 : vector<32x1xf32> to vector<32x256xf32>
    %5 = arith.addf %3, %4 : vector<32x256xf32>
    %cst_5 = arith.constant 0.000000e+00 : f32
    %6 = vector.broadcast %cst_5 : f32 to vector<32x256xf32>
    %7 = arith.cmpf ogt, %5, %6 : vector<32x256xf32>
    %cst_6 = arith.constant 0.00999999977 : f32
    %8 = vector.broadcast %cst_6 : f32 to vector<32x256xf32>
    %9 = arith.mulf %8, %5 : vector<32x256xf32>
    %10 = arith.select %7, %5, %9 : vector<32x256xi1>, vector<32x256xf32>
    %11 = arith.truncf %10 : vector<32x256xf32> to vector<32x256xbf16>
    %c0_7 = arith.constant 0 : index
    %c0_8 = arith.constant 0 : index
    %12 = vector.load %arg4[%c0_7, %c0_8] : memref<64x32xbf16, #tpu.memory_space<vmem>>, vector<64x32xbf16>
    %c0_9 = arith.constant 0 : index
    %c0_10 = arith.constant 0 : index
    %13 = vector.load %arg5[%c0_9, %c0_10] : memref<64x1xf32, #tpu.memory_space<vmem>>, vector<64x1xf32>
    %cst_11 = arith.constant dense<0.000000e+00> : vector<64x256xf32>
    %14 = tpu.matmul %12, %11, %cst_11 {dimension_numbers = #tpu.dot_dimension_numbers<[1], [0], [0], [1], [0, 0, 1, 1], [], []>} : vector<64x32xbf16>, vector<32x256xbf16>, vector<64x256xf32> -> vector<64x256xf32>
    %15 = vector.broadcast %13 : vector<64x1xf32> to vector<64x256xf32>
    %16 = arith.addf %14, %15 : vector<64x256xf32>
    %cst_12 = arith.constant 0.000000e+00 : f32
    %17 = vector.broadcast %cst_12 : f32 to vector<64x256xf32>
    %18 = arith.cmpf ogt, %16, %17 : vector<64x256xf32>
    %cst_13 = arith.constant 0.00999999977 : f32
    %19 = vector.broadcast %cst_13 : f32 to vector<64x256xf32>
    %20 = arith.mulf %19, %16 : vector<64x256xf32>
    %21 = arith.select %18, %16, %20 : vector<64x256xi1>, vector<64x256xf32>
    %22 = arith.truncf %21 : vector<64x256xf32> to vector<64x256xbf16>
    %c0_14 = arith.constant 0 : index
    %c0_15 = arith.constant 0 : index
    %23 = vector.load %arg6[%c0_14, %c0_15] : memref<64x64xbf16, #tpu.memory_space<vmem>>, vector<64x64xbf16>
    %c0_16 = arith.constant 0 : index
    %c0_17 = arith.constant 0 : index
    %24 = vector.load %arg7[%c0_16, %c0_17] : memref<64x1xf32, #tpu.memory_space<vmem>>, vector<64x1xf32>
    %cst_18 = arith.constant dense<0.000000e+00> : vector<64x256xf32>
    %25 = tpu.matmul %23, %22, %cst_18 {dimension_numbers = #tpu.dot_dimension_numbers<[1], [0], [0], [1], [0, 0, 1, 1], [], []>} : vector<64x64xbf16>, vector<64x256xbf16>, vector<64x256xf32> -> vector<64x256xf32>
    %26 = vector.broadcast %24 : vector<64x1xf32> to vector<64x256xf32>
    %27 = arith.addf %25, %26 : vector<64x256xf32>
    %cst_19 = arith.constant 0.000000e+00 : f32
    %28 = vector.broadcast %cst_19 : f32 to vector<64x256xf32>
    %29 = arith.cmpf ogt, %27, %28 : vector<64x256xf32>
    %cst_20 = arith.constant 0.00999999977 : f32
    %30 = vector.broadcast %cst_20 : f32 to vector<64x256xf32>
    %31 = arith.mulf %30, %27 : vector<64x256xf32>
    %32 = arith.select %29, %27, %31 : vector<64x256xi1>, vector<64x256xf32>
    %33 = arith.truncf %32 : vector<64x256xf32> to vector<64x256xbf16>
    %c0_21 = arith.constant 0 : index
    %c0_22 = arith.constant 0 : index
    %34 = vector.load %arg8[%c0_21, %c0_22] : memref<128x64xbf16, #tpu.memory_space<vmem>>, vector<128x64xbf16>
    %c0_23 = arith.constant 0 : index
    %c0_24 = arith.constant 0 : index
    %35 = vector.load %arg9[%c0_23, %c0_24] : memref<128x1xf32, #tpu.memory_space<vmem>>, vector<128x1xf32>
    %cst_25 = arith.constant dense<0.000000e+00> : vector<128x256xf32>
    %36 = tpu.matmul %34, %33, %cst_25 {dimension_numbers = #tpu.dot_dimension_numbers<[1], [0], [0], [1], [0, 0, 1, 1], [], []>} : vector<128x64xbf16>, vector<64x256xbf16>, vector<128x256xf32> -> vector<128x256xf32>
    %37 = vector.broadcast %35 : vector<128x1xf32> to vector<128x256xf32>
    %38 = arith.addf %36, %37 : vector<128x256xf32>
    %cst_26 = arith.constant 0.000000e+00 : f32
    %39 = vector.broadcast %cst_26 : f32 to vector<128x256xf32>
    %40 = arith.cmpf ogt, %38, %39 : vector<128x256xf32>
    %cst_27 = arith.constant 0.00999999977 : f32
    %41 = vector.broadcast %cst_27 : f32 to vector<128x256xf32>
    %42 = arith.mulf %41, %38 : vector<128x256xf32>
    %43 = arith.select %40, %38, %42 : vector<128x256xi1>, vector<128x256xf32>
    %44 = arith.truncf %43 : vector<128x256xf32> to vector<128x256xbf16>
    %c0_28 = arith.constant 0 : index
    %c0_29 = arith.constant 0 : index
    %45 = vector.load %arg10[%c0_28, %c0_29] : memref<64x128xbf16, #tpu.memory_space<vmem>>, vector<64x128xbf16>
    %c0_30 = arith.constant 0 : index
    %c0_31 = arith.constant 0 : index
    %46 = vector.load %arg11[%c0_30, %c0_31] : memref<64x1xf32, #tpu.memory_space<vmem>>, vector<64x1xf32>
    %cst_32 = arith.constant dense<0.000000e+00> : vector<64x256xf32>
    %47 = tpu.matmul %45, %44, %cst_32 {dimension_numbers = #tpu.dot_dimension_numbers<[1], [0], [0], [1], [0, 0, 1, 1], [], []>} : vector<64x128xbf16>, vector<128x256xbf16>, vector<64x256xf32> -> vector<64x256xf32>
    %48 = vector.broadcast %46 : vector<64x1xf32> to vector<64x256xf32>
    %49 = arith.addf %47, %48 : vector<64x256xf32>
    %cst_33 = arith.constant 0.000000e+00 : f32
    %50 = vector.broadcast %cst_33 : f32 to vector<64x256xf32>
    %51 = arith.cmpf ogt, %49, %50 : vector<64x256xf32>
    %cst_34 = arith.constant 0.00999999977 : f32
    %52 = vector.broadcast %cst_34 : f32 to vector<64x256xf32>
    %53 = arith.mulf %52, %49 : vector<64x256xf32>
    %54 = arith.select %51, %49, %53 : vector<64x256xi1>, vector<64x256xf32>
    %55 = arith.truncf %54 : vector<64x256xf32> to vector<64x256xbf16>
    %c0_35 = arith.constant 0 : index
    %c0_36 = arith.constant 0 : index
    %56 = vector.load %arg12[%c0_35, %c0_36] : memref<64x64xbf16, #tpu.memory_space<vmem>>, vector<64x64xbf16>
    %c0_37 = arith.constant 0 : index
    %c0_38 = arith.constant 0 : index
    %57 = vector.load %arg13[%c0_37, %c0_38] : memref<64x1xf32, #tpu.memory_space<vmem>>, vector<64x1xf32>
    %cst_39 = arith.constant dense<0.000000e+00> : vector<64x256xf32>
    %58 = tpu.matmul %56, %55, %cst_39 {dimension_numbers = #tpu.dot_dimension_numbers<[1], [0], [0], [1], [0, 0, 1, 1], [], []>} : vector<64x64xbf16>, vector<64x256xbf16>, vector<64x256xf32> -> vector<64x256xf32>
    %59 = vector.broadcast %57 : vector<64x1xf32> to vector<64x256xf32>
    %60 = arith.addf %58, %59 : vector<64x256xf32>
    %cst_40 = arith.constant 0.000000e+00 : f32
    %61 = vector.broadcast %cst_40 : f32 to vector<64x256xf32>
    %62 = arith.cmpf ogt, %60, %61 : vector<64x256xf32>
    %cst_41 = arith.constant 0.00999999977 : f32
    %63 = vector.broadcast %cst_41 : f32 to vector<64x256xf32>
    %64 = arith.mulf %63, %60 : vector<64x256xf32>
    %65 = arith.select %62, %60, %64 : vector<64x256xi1>, vector<64x256xf32>
    %66 = arith.truncf %65 : vector<64x256xf32> to vector<64x256xbf16>
    %c0_42 = arith.constant 0 : index
    %c0_43 = arith.constant 0 : index
    %67 = vector.load %arg14[%c0_42, %c0_43] : memref<16x64xbf16, #tpu.memory_space<vmem>>, vector<16x64xbf16>
    %c0_44 = arith.constant 0 : index
    %c0_45 = arith.constant 0 : index
    %68 = vector.load %arg15[%c0_44, %c0_45] : memref<16x1xf32, #tpu.memory_space<vmem>>, vector<16x1xf32>
    %cst_46 = arith.constant dense<0.000000e+00> : vector<16x256xf32>
    %69 = tpu.matmul %67, %66, %cst_46 {dimension_numbers = #tpu.dot_dimension_numbers<[1], [0], [0], [1], [0, 0, 1, 1], [], []>} : vector<16x64xbf16>, vector<64x256xbf16>, vector<16x256xf32> -> vector<16x256xf32>
    %70 = vector.broadcast %68 : vector<16x1xf32> to vector<16x256xf32>
    %71 = arith.addf %69, %70 : vector<16x256xf32>
    %cst_47 = arith.constant 0.000000e+00 : f32
    %72 = vector.broadcast %cst_47 : f32 to vector<16x256xf32>
    %73 = arith.cmpf ogt, %71, %72 : vector<16x256xf32>
    %cst_48 = arith.constant 0.00999999977 : f32
    %74 = vector.broadcast %cst_48 : f32 to vector<16x256xf32>
    %75 = arith.mulf %74, %71 : vector<16x256xf32>
    %76 = arith.select %73, %71, %75 : vector<16x256xi1>, vector<16x256xf32>
    %c0_49 = arith.constant 0 : index
    %c0_50 = arith.constant 0 : index
    %77 = vector.load %arg16[%c0_49, %c0_50] : memref<1x16xf32, #tpu.memory_space<vmem>>, vector<1x16xf32>
    %c0_51 = arith.constant 0 : index
    %c0_52 = arith.constant 0 : index
    %78 = vector.load %arg17[%c0_51, %c0_52] : memref<1x1xf32, #tpu.memory_space<vmem>>, vector<1x1xf32>
    %cst_53 = arith.constant dense<0.000000e+00> : vector<1x256xf32>
    %79 = tpu.matmul %77, %76, %cst_53 {dimension_numbers = #tpu.dot_dimension_numbers<[1], [0], [0], [1], [0, 0, 1, 1], [], []>} : vector<1x16xf32>, vector<16x256xf32>, vector<1x256xf32> -> vector<1x256xf32>
    %80 = vector.broadcast %78 : vector<1x1xf32> to vector<1x256xf32>
    %81 = arith.addf %79, %80 : vector<1x256xf32>
    %cst_54 = arith.constant 0.000000e+00 : f32
    %82 = vector.broadcast %cst_54 : f32 to vector<1x256xf32>
    %83 = arith.subf %82, %81 : vector<1x256xf32>
    %84 = math.exp %83 : vector<1x256xf32>
    %cst_55 = arith.constant 1.000000e+00 : f32
    %85 = vector.broadcast %cst_55 : f32 to vector<1x256xf32>
    %86 = arith.addf %85, %84 : vector<1x256xf32>
    %87 = tpu.reciprocal %86 {approx = true} : vector<1x256xf32> -> vector<1x256xf32>
    %c0_56 = arith.constant 0 : index
    %c0_57 = arith.constant 0 : index
    %88 = vector.load %arg18[%c0_56, %c0_57] : memref<1x256xf32, #tpu.memory_space<vmem>>, vector<1x256xf32>
    tpu.vector_store %arg18[%c0_56, %c0_57], %87 {strides = array<i32>} : memref<1x256xf32, #tpu.memory_space<vmem>>, vector<1x256xf32>,
    return
  }
  func.func @transform_0(%arg0: i32) -> (i32, i32) {
    %c0_i32 = arith.constant 0 : i32
    %c0_i32_0 = arith.constant 0 : i32
    return %c0_i32, %arg0 : i32, i32
  }
  func.func @transform_1(%arg0: i32) -> (i32, i32) {
    %c0_i32 = arith.constant 0 : i32
    %c0_i32_0 = arith.constant 0 : i32
    %c0_i32_1 = arith.constant 0 : i32
    return %c0_i32, %c0_i32_0 : i32, i32
  }
  func.func @transform_2(%arg0: i32) -> (i32, i32) {
    %c0_i32 = arith.constant 0 : i32
    %c0_i32_0 = arith.constant 0 : i32
    %c0_i32_1 = arith.constant 0 : i32
    return %c0_i32, %c0_i32_0 : i32, i32
  }
  func.func @transform_3(%arg0: i32) -> (i32, i32) {
    %c0_i32 = arith.constant 0 : i32
    %c0_i32_0 = arith.constant 0 : i32
    %c0_i32_1 = arith.constant 0 : i32
    return %c0_i32, %c0_i32_0 : i32, i32
  }
  func.func @transform_4(%arg0: i32) -> (i32, i32) {
    %c0_i32 = arith.constant 0 : i32
    %c0_i32_0 = arith.constant 0 : i32
    %c0_i32_1 = arith.constant 0 : i32
    return %c0_i32, %c0_i32_0 : i32, i32
  }
  func.func @transform_5(%arg0: i32) -> (i32, i32) {
    %c0_i32 = arith.constant 0 : i32
    %c0_i32_0 = arith.constant 0 : i32
    %c0_i32_1 = arith.constant 0 : i32
    return %c0_i32, %c0_i32_0 : i32, i32
  }
  func.func @transform_6(%arg0: i32) -> (i32, i32) {
    %c0_i32 = arith.constant 0 : i32
    %c0_i32_0 = arith.constant 0 : i32
    %c0_i32_1 = arith.constant 0 : i32
    return %c0_i32, %c0_i32_0 : i32, i32
  }
  func.func @transform_7(%arg0: i32) -> (i32, i32) {
    %c0_i32 = arith.constant 0 : i32
    %c0_i32_0 = arith.constant 0 : i32
    %c0_i32_1 = arith.constant 0 : i32
    return %c0_i32, %c0_i32_0 : i32, i32
  }
  func.func @transform_8(%arg0: i32) -> (i32, i32) {
    %c0_i32 = arith.constant 0 : i32
    %c0_i32_0 = arith.constant 0 : i32
    %c0_i32_1 = arith.constant 0 : i32
    return %c0_i32, %c0_i32_0 : i32, i32
  }
  func.func @transform_9(%arg0: i32) -> (i32, i32) {
    %c0_i32 = arith.constant 0 : i32
    %c0_i32_0 = arith.constant 0 : i32
    %c0_i32_1 = arith.constant 0 : i32
    return %c0_i32, %c0_i32_0 : i32, i32
  }
  func.func @transform_10(%arg0: i32) -> (i32, i32) {
    %c0_i32 = arith.constant 0 : i32
    %c0_i32_0 = arith.constant 0 : i32
    %c0_i32_1 = arith.constant 0 : i32
    return %c0_i32, %c0_i32_0 : i32, i32
  }
  func.func @transform_11(%arg0: i32) -> (i32, i32) {
    %c0_i32 = arith.constant 0 : i32
    %c0_i32_0 = arith.constant 0 : i32
    %c0_i32_1 = arith.constant 0 : i32
    return %c0_i32, %c0_i32_0 : i32, i32
  }
  func.func @transform_12(%arg0: i32) -> (i32, i32) {
    %c0_i32 = arith.constant 0 : i32
    %c0_i32_0 = arith.constant 0 : i32
    %c0_i32_1 = arith.constant 0 : i32
    return %c0_i32, %c0_i32_0 : i32, i32
  }
  func.func @transform_13(%arg0: i32) -> (i32, i32) {
    %c0_i32 = arith.constant 0 : i32
    %c0_i32_0 = arith.constant 0 : i32
    %c0_i32_1 = arith.constant 0 : i32
    return %c0_i32, %c0_i32_0 : i32, i32
  }
  func.func @transform_14(%arg0: i32) -> (i32, i32) {
    %c0_i32 = arith.constant 0 : i32
    %c0_i32_0 = arith.constant 0 : i32
    %c0_i32_1 = arith.constant 0 : i32
    return %c0_i32, %c0_i32_0 : i32, i32
  }
  func.func @transform_15(%arg0: i32) -> (i32, i32) {
    %c0_i32 = arith.constant 0 : i32
    %c0_i32_0 = arith.constant 0 : i32
    %c0_i32_1 = arith.constant 0 : i32
    return %c0_i32, %c0_i32_0 : i32, i32
  }
  func.func @transform_16(%arg0: i32) -> (i32, i32) {
    %c0_i32 = arith.constant 0 : i32
    %c0_i32_0 = arith.constant 0 : i32
    %c0_i32_1 = arith.constant 0 : i32
    return %c0_i32, %c0_i32_0 : i32, i32
  }
  func.func @transform_17(%arg0: i32) -> (i32, i32) {
    %c0_i32 = arith.constant 0 : i32
    %c0_i32_0 = arith.constant 0 : i32
    return %c0_i32, %arg0 : i32, i32
  }
}

</mosaic_0001>

<llo_original>
// kernel: flash_forward.1
$region0: #{flash_forward.1}
  #allocation0 [shape = 'u32[]', space=smem, size = 0x4, offset = 0x4, fixed_abs, tag = 'smem constant byte address 0x4 - core index']
  #allocation1 [shape = 'u32[144,128]{1,0:T(1,128)}', space=vmem, size = 0x12000, scoped, tag = 'internal scratch']
  #allocation2 [shape = 'f32[1,1]{1,0:T(1,128)S(1)}', space=vmem, size = 0x200, scoped, tag = 'scoped memory for flash_forward.1']
  %s0 = inlined_call_operand.vmem [shape: bf16[32,256], index: 0, kind: input, shape index: {}]
  %s1 = inlined_call_operand.vmem [shape: bf16[32,32], index: 1, kind: input, shape index: {}]
  %s2 = inlined_call_operand.vmem [shape: f32[32,1], index: 2, kind: input, shape index: {}]
  %s3 = inlined_call_operand.vmem [shape: bf16[64,32], index: 3, kind: input, shape index: {}]
  %s4 = inlined_call_operand.vmem [shape: f32[64,1], index: 4, kind: input, shape index: {}]
  %s5 = inlined_call_operand.vmem [shape: bf16[64,64], index: 5, kind: input, shape index: {}]
  %s6 = inlined_call_operand.vmem [shape: f32[64,1], index: 6, kind: input, shape index: {}]
  %s7 = inlined_call_operand.vmem [shape: bf16[128,64], index: 7, kind: input, shape index: {}]
  %s8 = inlined_call_operand.vmem [shape: f32[128,1], index: 8, kind: input, shape index: {}]
  %s9 = inlined_call_operand.vmem [shape: bf16[64,128], index: 9, kind: input, shape index: {}]
  %s10 = inlined_call_operand.vmem [shape: f32[64,1], index: 10, kind: input, shape index: {}]
  %s11 = inlined_call_operand.vmem [shape: bf16[64,64], index: 11, kind: input, shape index: {}]
  %s12 = inlined_call_operand.vmem [shape: f32[64,1], index: 12, kind: input, shape index: {}]
  %s13 = inlined_call_operand.vmem [shape: bf16[16,64], index: 13, kind: input, shape index: {}]
  %s14 = inlined_call_operand.vmem [shape: f32[16,1], index: 14, kind: input, shape index: {}]
  %s15 = inlined_call_operand.vmem [shape: f32[1,16], index: 15, kind: input, shape index: {}]
  %s16 = inlined_call_operand.<no memory space> [shape: f32[1,1], index: 16, kind: input, shape index: {}]
  %s17 = inlined_call_operand.vmem [shape: f32[1,256], index: 17, kind: output, shape index: {}]
  %s18 = sld [smem:[#allocation0]]
  $region78: #{flash_forward.1} parent=0
    _
  %s20 = ssub.s32 1, %s18
  %s21 = scalar_select 0, %s20, %s18
  %v22 = vstv %s16
  %23 = vst [vmem:[#allocation2] sm:$0x1] %v22
  // Predicated region
  $region2: #{flash_forward.1} parent=0 // pred_check
    _
  $region3: #{flash_forward.1} parent=0 // pred_check_branch
    %25 = sbr.rel (0) target = $region5
  $region4: #{flash_forward.1} parent=0 // pred_region
    _
  $region5: #{flash_forward.1} parent=0 // pred_fallthru
    _
  // Predicated region
  $region6: #{flash_forward.1} parent=0 // pred_check
    _
  $region7: #{flash_forward.1} parent=0 // pred_check_branch
    %27 = sbr.rel (0) target = $region9
  $region8: #{flash_forward.1} parent=0 // pred_region
    _
  $region9: #{flash_forward.1} parent=0 // pred_fallthru
    _
  // Predicated region
  $region10: #{flash_forward.1} parent=0 // pred_check
    _
  $region11: #{flash_forward.1} parent=0 // pred_check_branch
    %29 = sbr.rel (0) target = $region13
  $region12: #{flash_forward.1} parent=0 // pred_region
    _
  $region13: #{flash_forward.1} parent=0 // pred_fallthru
    _
  // Predicated region
  $region14: #{flash_forward.1} parent=0 // pred_check
    _
  $region15: #{flash_forward.1} parent=0 // pred_check_branch
    %31 = sbr.rel (0) target = $region17
  $region16: #{flash_forward.1} parent=0 // pred_region
    _
  $region17: #{flash_forward.1} parent=0 // pred_fallthru
    _
  // Predicated region
  $region18: #{flash_forward.1} parent=0 // pred_check
    _
  $region19: #{flash_forward.1} parent=0 // pred_check_branch
    %33 = sbr.rel (0) target = $region21
  $region20: #{flash_forward.1} parent=0 // pred_region
    _
  $region21: #{flash_forward.1} parent=0 // pred_fallthru
    _
  // Predicated region
  $region22: #{flash_forward.1} parent=0 // pred_check
    _
  $region23: #{flash_forward.1} parent=0 // pred_check_branch
    %35 = sbr.rel (0) target = $region25
  $region24: #{flash_forward.1} parent=0 // pred_region
    _
  $region25: #{flash_forward.1} parent=0 // pred_fallthru
    _
  // Predicated region
  $region26: #{flash_forward.1} parent=0 // pred_check
    _
  $region27: #{flash_forward.1} parent=0 // pred_check_branch
    %37 = sbr.rel (0) target = $region29
  $region28: #{flash_forward.1} parent=0 // pred_region
    _
  $region29: #{flash_forward.1} parent=0 // pred_fallthru
    _
  // Predicated region
  $region30: #{flash_forward.1} parent=0 // pred_check
    _
  $region31: #{flash_forward.1} parent=0 // pred_check_branch
    %39 = sbr.rel (0) target = $region33
  $region32: #{flash_forward.1} parent=0 // pred_region
    _
  $region33: #{flash_forward.1} parent=0 // pred_fallthru
    _
  // Predicated region
  $region34: #{flash_forward.1} parent=0 // pred_check
    _
  $region35: #{flash_forward.1} parent=0 // pred_check_branch
    %41 = sbr.rel (0) target = $region37
  $region36: #{flash_forward.1} parent=0 // pred_region
    _
  $region37: #{flash_forward.1} parent=0 // pred_fallthru
    _
  // Predicated region
  $region38: #{flash_forward.1} parent=0 // pred_check
    _
  $region39: #{flash_forward.1} parent=0 // pred_check_branch
    %43 = sbr.rel (0) target = $region41
  $region40: #{flash_forward.1} parent=0 // pred_region
    _
  $region41: #{flash_forward.1} parent=0 // pred_fallthru
    _
  // Predicated region
  $region42: #{flash_forward.1} parent=0 // pred_check
    _
  $region43: #{flash_forward.1} parent=0 // pred_check_branch
    %45 = sbr.rel (0) target = $region45
  $region44: #{flash_forward.1} parent=0 // pred_region
    _
  $region45: #{flash_forward.1} parent=0 // pred_fallthru
    _
  // Predicated region
  $region46: #{flash_forward.1} parent=0 // pred_check
    _
  $region47: #{flash_forward.1} parent=0 // pred_check_branch
    %47 = sbr.rel (0) target = $region49
  $region48: #{flash_forward.1} parent=0 // pred_region
    _
  $region49: #{flash_forward.1} parent=0 // pred_fallthru
    _
  // Predicated region
  $region50: #{flash_forward.1} parent=0 // pred_check
    _
  $region51: #{flash_forward.1} parent=0 // pred_check_branch
    %49 = sbr.rel (0) target = $region53
  $region52: #{flash_forward.1} parent=0 // pred_region
    _
  $region53: #{flash_forward.1} parent=0 // pred_fallthru
    _
  // Predicated region
  $region54: #{flash_forward.1} parent=0 // pred_check
    _
  $region55: #{flash_forward.1} parent=0 // pred_check_branch
    %51 = sbr.rel (0) target = $region57
  $region56: #{flash_forward.1} parent=0 // pred_region
    _
  $region57: #{flash_forward.1} parent=0 // pred_fallthru
    _
  // Predicated region
  $region58: #{flash_forward.1} parent=0 // pred_check
    _
  $region59: #{flash_forward.1} parent=0 // pred_check_branch
    %53 = sbr.rel (0) target = $region61
  $region60: #{flash_forward.1} parent=0 // pred_region
    _
  $region61: #{flash_forward.1} parent=0 // pred_fallthru
    _
  // Predicated region
  $region62: #{flash_forward.1} parent=0 // pred_check
    _
  $region63: #{flash_forward.1} parent=0 // pred_check_branch
    %55 = sbr.rel (0) target = $region65
  $region64: #{flash_forward.1} parent=0 // pred_region
    _
  $region65: #{flash_forward.1} parent=0 // pred_fallthru
    _
  // Predicated region
  $region66: #{flash_forward.1} parent=0 // pred_check
    _
  $region67: #{flash_forward.1} parent=0 // pred_check_branch
    %57 = sbr.rel (0) target = $region69
  $region68: #{flash_forward.1} parent=0 // pred_region
    _
  $region69: #{flash_forward.1} parent=0 // pred_fallthru
    _
  %v59 = vld [vmem:[%s0] sm:$0xff]
  %v60 = vld [vmem:[%s0 + $0x8] sm:$0xff]
  %v61 = vld [vmem:[%s0 + $0x10] sm:$0xff]
  %v62 = vld [vmem:[%s0 + $0x18] sm:$0xff]
  %v63 = vld [vmem:[%s1] sm:$0xf]
  %v64 = vld [vmem:[%s1 + $0x4] sm:$0xf]
  %v65 = vld [vmem:[%s1 + $0x8] sm:$0xf]
  %v66 = vld [vmem:[%s1 + $0xc] sm:$0xf]
  %v67 = vld [vmem:[%s2] sm:$0xff]
  %v68 = vld [vmem:[%s2 + $0x8] sm:$0xff]
  %v69 = vld [vmem:[%s2 + $0x10] sm:$0xff]
  %v70 = vld [vmem:[%s2 + $0x18] sm:$0xff]
  %72 = vset.pattern.permute.xlu0 0
  %73 = vperm.xlu0 %72, %v67
  %v74 = vpop.permute.xlu0 %73
  %77 = vset.pattern.permute.xlu0 0
  %78 = vperm.xlu0 %77, %v68
  %v79 = vpop.permute.xlu0 %78
  %82 = vset.pattern.permute.xlu0 0
  %83 = vperm.xlu0 %82, %v69
  %v84 = vpop.permute.xlu0 %83
  %87 = vset.pattern.permute.xlu0 0
  %88 = vperm.xlu0 %87, %v70
  %v89 = vpop.permute.xlu0 %88
  %v95 = vunpack.c.l.b16 %v63
  %v96 = vunpack.c.l.b16 %v64
  %v97 = vunpack.c.l.b16 %v65
  %v98 = vunpack.c.l.b16 %v66
  %v99 = vpack.c.b16 %v96, %v95
  %v100 = vpack.c.b16 %v98, %v97
  %v105 = vunpack.c.l.b16 %v59
  %v106 = vunpack.c.h.b16 %v59
  %v107 = vunpack.c.l.b16 %v60
  %v108 = vunpack.c.h.b16 %v60
  %v109 = vunpack.c.l.b16 %v61
  %v110 = vunpack.c.h.b16 %v61
  %v111 = vunpack.c.l.b16 %v62
  %v112 = vunpack.c.h.b16 %v62
  %v113 = vpack.c.b16 %v107, %v105
  %v114 = vpack.c.b16 %v108, %v106
  %v115 = vpack.c.b16 %v111, %v109
  %v116 = vpack.c.b16 %v112, %v110
  %vm121 = vcmask 261120
  %v123 = vsel %vm121, %v99, 0
  %v126 = vsel %vm121, %v100, 0
  %128 = vmatprep.subr.bf16.mxu0 %v114
  %129 = vmatpush1.bf16.msra.mxu0 %v113
  %130 = vmatprep.subr.bf16.mxu0 %v116
  %131 = vmatpush1.bf16.msra.mxu0 %v115
  %132 = vmatprep.subr.bf16.mxu0 0
  %133 = vmatpush1.bf16.msra.mxu0 0
  %134 = vmatprep.subr.bf16.mxu0 0
  %135 = vmatpush1.bf16.msra.mxu0 0
  %136 = vmatprep.subr.bf16.mxu0 0
  %137 = vmatpush1.bf16.msra.mxu0 0
  %138 = vmatprep.subr.bf16.mxu0 0
  %139 = vmatpush1.bf16.msra.mxu0 0
  %140 = vmatprep.subr.bf16.mxu0 0
  %141 = vmatpush1.bf16.msra.mxu0 0
  %142 = vmatprep.subr.bf16.mxu0 0
  %143 = vmatpush1.bf16.msra.mxu0 0
  %144 = vmatprep.subr.bf16.mxu0 0
  %145 = vmatpush1.bf16.msra.mxu0 0
  %146 = vmatprep.subr.bf16.mxu0 0
  %147 = vmatpush1.bf16.msra.mxu0 0
  %148 = vmatprep.subr.bf16.mxu0 0
  %149 = vmatpush1.bf16.msra.mxu0 0
  %150 = vmatprep.subr.bf16.mxu0 0
  %151 = vmatpush1.bf16.msra.mxu0 0
  %152 = vmatprep.subr.bf16.mxu0 0
  %153 = vmatpush1.bf16.msra.mxu0 0
  %154 = vmatprep.subr.bf16.mxu0 0
  %155 = vmatpush1.bf16.msra.mxu0 0
  %156 = vmatprep.subr.bf16.mxu0 0
  %157 = vmatpush1.bf16.msra.mxu0 0
  %158 = vmatprep.subr.bf16.mxu0 0
  %159 = vmatpush1.bf16.msra.mxu0 0
  %160 = vmatprep.mubr.bf16.mxu0 0
  %161 = vmatmul.mubr.bf16.gmra.mrb[0].mxu0 %v123
  %v162 = vpop.f32.mrb[0].mxu0
  %v163 = vadd.f32 %v74, %v162
  %v164 = vpop.f32.mrb[0].mxu0
  %v165 = vadd.f32 %v74, %v164
  %v166 = vpop.f32.mrb[0].mxu0
  %v167 = vadd.f32 %v79, %v166
  %v168 = vpop.f32.mrb[0].mxu0
  %v169 = vadd.f32 %v79, %v168
  %170 = vmatprep.mubr.bf16.mxu0 0
  %171 = vmatmul.mubr.bf16.gmra.mrb[0].mxu0 %v126
  %v172 = vpop.f32.mrb[0].mxu0
  %v173 = vadd.f32 %v84, %v172
  %v174 = vpop.f32.mrb[0].mxu0
  %v175 = vadd.f32 %v84, %v174
  %v176 = vpop.f32.mrb[0].mxu0
  %v177 = vadd.f32 %v89, %v176
  %v178 = vpop.f32.mrb[0].mxu0
  %v179 = vadd.f32 %v89, %v178
  %180 = vdwg.mxu0
  %vm181 = vcmp.gt.f32.partialorder %v163, 0.0
  %vm182 = vcmp.gt.f32.partialorder %v165, 0.0
  %vm183 = vcmp.gt.f32.partialorder %v167, 0.0
  %vm184 = vcmp.gt.f32.partialorder %v169, 0.0
  %vm185 = vcmp.gt.f32.partialorder %v173, 0.0
  %vm186 = vcmp.gt.f32.partialorder %v175, 0.0
  %vm187 = vcmp.gt.f32.partialorder %v177, 0.0
  %vm188 = vcmp.gt.f32.partialorder %v179, 0.0
  %v189 = vmul.f32 %v163, 0.01
  %v190 = vmul.f32 %v165, 0.01
  %v191 = vmul.f32 %v167, 0.01
  %v192 = vmul.f32 %v169, 0.01
  %v193 = vmul.f32 %v173, 0.01
  %v194 = vmul.f32 %v175, 0.01
  %v195 = vmul.f32 %v177, 0.01
  %v196 = vmul.f32 %v179, 0.01
  %v197 = vsel %vm181, %v163, %v189
  %v198 = vsel %vm182, %v165, %v190
  %v199 = vsel %vm183, %v167, %v191
  %v200 = vsel %vm184, %v169, %v192
  %v201 = vsel %vm185, %v173, %v193
  %v202 = vsel %vm186, %v175, %v194
  %v203 = vsel %vm187, %v177, %v195
  %v204 = vsel %vm188, %v179, %v196
  %v205 = vpack.c.bf16 %v199, %v197
  %v206 = vpack.c.bf16 %v200, %v198
  %v207 = vpack.c.bf16 %v203, %v201
  %v208 = vpack.c.bf16 %v204, %v202
  %v209 = vld [vmem:[%s3] sm:$0xf]
  %v210 = vld [vmem:[%s3 + $0x4] sm:$0xf]
  %v211 = vld [vmem:[%s3 + $0x8] sm:$0xf]
  %v212 = vld [vmem:[%s3 + $0xc] sm:$0xf]
  %v213 = vld [vmem:[%s3 + $0x10] sm:$0xf]
  %v214 = vld [vmem:[%s3 + $0x14] sm:$0xf]
  %v215 = vld [vmem:[%s3 + $0x18] sm:$0xf]
  %v216 = vld [vmem:[%s3 + $0x1c] sm:$0xf]
  %v217 = vld [vmem:[%s4] sm:$0xff]
  %v218 = vld [vmem:[%s4 + $0x8] sm:$0xff]
  %v219 = vld [vmem:[%s4 + $0x10] sm:$0xff]
  %v220 = vld [vmem:[%s4 + $0x18] sm:$0xff]
  %v221 = vld [vmem:[%s4 + $0x20] sm:$0xff]
  %v222 = vld [vmem:[%s4 + $0x28] sm:$0xff]
  %v223 = vld [vmem:[%s4 + $0x30] sm:$0xff]
  %v224 = vld [vmem:[%s4 + $0x38] sm:$0xff]
  %226 = vset.pattern.permute.xlu0 0
  %227 = vperm.xlu0 %226, %v217
  %v228 = vpop.permute.xlu0 %227
  %231 = vset.pattern.permute.xlu0 0
  %232 = vperm.xlu0 %231, %v218
  %v233 = vpop.permute.xlu0 %232
  %236 = vset.pattern.permute.xlu0 0
  %237 = vperm.xlu0 %236, %v219
  %v238 = vpop.permute.xlu0 %237
  %241 = vset.pattern.permute.xlu0 0
  %242 = vperm.xlu0 %241, %v220
  %v243 = vpop.permute.xlu0 %242
  %246 = vset.pattern.permute.xlu0 0
  %247 = vperm.xlu0 %246, %v221
  %v248 = vpop.permute.xlu0 %247
  %251 = vset.pattern.permute.xlu0 0
  %252 = vperm.xlu0 %251, %v222
  %v253 = vpop.permute.xlu0 %252
  %256 = vset.pattern.permute.xlu0 0
  %257 = vperm.xlu0 %256, %v223
  %v258 = vpop.permute.xlu0 %257
  %261 = vset.pattern.permute.xlu0 0
  %262 = vperm.xlu0 %261, %v224
  %v263 = vpop.permute.xlu0 %262
  %v273 = vunpack.c.l.b16 %v209
  %v274 = vunpack.c.l.b16 %v210
  %v275 = vunpack.c.l.b16 %v211
  %v276 = vunpack.c.l.b16 %v212
  %v277 = vunpack.c.l.b16 %v213
  %v278 = vunpack.c.l.b16 %v214
  %v279 = vunpack.c.l.b16 %v215
  %v280 = vunpack.c.l.b16 %v216
  %v281 = vpack.c.b16 %v274, %v273
  %v282 = vpack.c.b16 %v276, %v275
  %v283 = vpack.c.b16 %v278, %v277
  %v284 = vpack.c.b16 %v280, %v279
  %v286 = vsel %vm121, %v281, 0
  %v289 = vsel %vm121, %v282, 0
  %v292 = vsel %vm121, %v283, 0
  %v295 = vsel %vm121, %v284, 0
  %297 = vmatprep.subr.bf16.mxu0 %v206
  %298 = vmatpush1.bf16.msra.mxu0 %v205
  %299 = vmatprep.subr.bf16.mxu0 %v208
  %300 = vmatpush1.bf16.msra.mxu0 %v207
  %301 = vmatprep.subr.bf16.mxu0 0
  %302 = vmatpush1.bf16.msra.mxu0 0
  %303 = vmatprep.subr.bf16.mxu0 0
  %304 = vmatpush1.bf16.msra.mxu0 0
  %305 = vmatprep.subr.bf16.mxu0 0
  %306 = vmatpush1.bf16.msra.mxu0 0
  %307 = vmatprep.subr.bf16.mxu0 0
  %308 = vmatpush1.bf16.msra.mxu0 0
  %309 = vmatprep.subr.bf16.mxu0 0
  %310 = vmatpush1.bf16.msra.mxu0 0
  %311 = vmatprep.subr.bf16.mxu0 0
  %312 = vmatpush1.bf16.msra.mxu0 0
  %313 = vmatprep.subr.bf16.mxu0 0
  %314 = vmatpush1.bf16.msra.mxu0 0
  %315 = vmatprep.subr.bf16.mxu0 0
  %316 = vmatpush1.bf16.msra.mxu0 0
  %317 = vmatprep.subr.bf16.mxu0 0
  %318 = vmatpush1.bf16.msra.mxu0 0
  %319 = vmatprep.subr.bf16.mxu0 0
  %320 = vmatpush1.bf16.msra.mxu0 0
  %321 = vmatprep.subr.bf16.mxu0 0
  %322 = vmatpush1.bf16.msra.mxu0 0
  %323 = vmatprep.subr.bf16.mxu0 0
  %324 = vmatpush1.bf16.msra.mxu0 0
  %325 = vmatprep.subr.bf16.mxu0 0
  %326 = vmatpush1.bf16.msra.mxu0 0
  %327 = vmatprep.subr.bf16.mxu0 0
  %328 = vmatpush1.bf16.msra.mxu0 0
  %329 = vmatprep.mubr.bf16.mxu0 0
  %330 = vmatmul.mubr.bf16.gmra.mrb[0].mxu0 %v286
  %v331 = vpop.f32.mrb[0].mxu0
  %v332 = vadd.f32 %v228, %v331
  %v333 = vpop.f32.mrb[0].mxu0
  %v334 = vadd.f32 %v228, %v333
  %v335 = vpop.f32.mrb[0].mxu0
  %v336 = vadd.f32 %v233, %v335
  %v337 = vpop.f32.mrb[0].mxu0
  %v338 = vadd.f32 %v233, %v337
  %339 = vmatprep.mubr.bf16.mxu0 0
  %340 = vmatmul.mubr.bf16.gmra.mrb[0].mxu0 %v289
  %v341 = vpop.f32.mrb[0].mxu0
  %v342 = vadd.f32 %v238, %v341
  %v343 = vpop.f32.mrb[0].mxu0
  %v344 = vadd.f32 %v238, %v343
  %v345 = vpop.f32.mrb[0].mxu0
  %v346 = vadd.f32 %v243, %v345
  %v347 = vpop.f32.mrb[0].mxu0
  %v348 = vadd.f32 %v243, %v347
  %349 = vmatprep.mubr.bf16.mxu0 0
  %350 = vmatmul.mubr.bf16.gmra.mrb[0].mxu0 %v292
  %v351 = vpop.f32.mrb[0].mxu0
  %v352 = vadd.f32 %v248, %v351
  %v353 = vpop.f32.mrb[0].mxu0
  %v354 = vadd.f32 %v248, %v353
  %v355 = vpop.f32.mrb[0].mxu0
  %v356 = vadd.f32 %v253, %v355
  %v357 = vpop.f32.mrb[0].mxu0
  %v358 = vadd.f32 %v253, %v357
  %359 = vmatprep.mubr.bf16.mxu0 0
  %360 = vmatmul.mubr.bf16.gmra.mrb[0].mxu0 %v295
  %v361 = vpop.f32.mrb[0].mxu0
  %v362 = vadd.f32 %v258, %v361
  %v363 = vpop.f32.mrb[0].mxu0
  %v364 = vadd.f32 %v258, %v363
  %v365 = vpop.f32.mrb[0].mxu0
  %v366 = vadd.f32 %v263, %v365
  %v367 = vpop.f32.mrb[0].mxu0
  %v368 = vadd.f32 %v263, %v367
  %369 = vdwg.mxu0
  %vm370 = vcmp.gt.f32.partialorder %v332, 0.0
  %vm371 = vcmp.gt.f32.partialorder %v334, 0.0
  %vm372 = vcmp.gt.f32.partialorder %v336, 0.0
  %vm373 = vcmp.gt.f32.partialorder %v338, 0.0
  %vm374 = vcmp.gt.f32.partialorder %v342, 0.0
  %vm375 = vcmp.gt.f32.partialorder %v344, 0.0
  %vm376 = vcmp.gt.f32.partialorder %v346, 0.0
  %vm377 = vcmp.gt.f32.partialorder %v348, 0.0
  %vm378 = vcmp.gt.f32.partialorder %v352, 0.0
  %vm379 = vcmp.gt.f32.partialorder %v354, 0.0
  %vm380 = vcmp.gt.f32.partialorder %v356, 0.0
  %vm381 = vcmp.gt.f32.partialorder %v358, 0.0
  %vm382 = vcmp.gt.f32.partialorder %v362, 0.0
  %vm383 = vcmp.gt.f32.partialorder %v364, 0.0
  %vm384 = vcmp.gt.f32.partialorder %v366, 0.0
  %vm385 = vcmp.gt.f32.partialorder %v368, 0.0
  %v386 = vmul.f32 %v332, 0.01
  %v387 = vmul.f32 %v334, 0.01
  %v388 = vmul.f32 %v336, 0.01
  %v389 = vmul.f32 %v338, 0.01
  %v390 = vmul.f32 %v342, 0.01
  %v391 = vmul.f32 %v344, 0.01
  %v392 = vmul.f32 %v346, 0.01
  %v393 = vmul.f32 %v348, 0.01
  %v394 = vmul.f32 %v352, 0.01
  %v395 = vmul.f32 %v354, 0.01
  %v396 = vmul.f32 %v356, 0.01
  %v397 = vmul.f32 %v358, 0.01
  %v398 = vmul.f32 %v362, 0.01
  %v399 = vmul.f32 %v364, 0.01
  %v400 = vmul.f32 %v366, 0.01
  %v401 = vmul.f32 %v368, 0.01
  %v402 = vsel %vm370, %v332, %v386
  %v403 = vsel %vm371, %v334, %v387
  %v404 = vsel %vm372, %v336, %v388
  %v405 = vsel %vm373, %v338, %v389
  %v406 = vsel %vm374, %v342, %v390
  %v407 = vsel %vm375, %v344, %v391
  %v408 = vsel %vm376, %v346, %v392
  %v409 = vsel %vm377, %v348, %v393
  %v410 = vsel %vm378, %v352, %v394
  %v411 = vsel %vm379, %v354, %v395
  %v412 = vsel %vm380, %v356, %v396
  %v413 = vsel %vm381, %v358, %v397
  %v414 = vsel %vm382, %v362, %v398
  %v415 = vsel %vm383, %v364, %v399
  %v416 = vsel %vm384, %v366, %v400
  %v417 = vsel %vm385, %v368, %v401
  %v418 = vpack.c.bf16 %v404, %v402
  %v419 = vpack.c.bf16 %v405, %v403
  %v420 = vpack.c.bf16 %v408, %v406
  %v421 = vpack.c.bf16 %v409, %v407
  %v422 = vpack.c.bf16 %v412, %v410
  %v423 = vpack.c.bf16 %v413, %v411
  %v424 = vpack.c.bf16 %v416, %v414
  %v425 = vpack.c.bf16 %v417, %v415
  %v426 = vld [vmem:[%s5] sm:$0xf]
  %v427 = vld [vmem:[%s5 + $0x4] sm:$0xf]
  %v428 = vld [vmem:[%s5 + $0x8] sm:$0xf]
  %v429 = vld [vmem:[%s5 + $0xc] sm:$0xf]
  %v430 = vld [vmem:[%s5 + $0x10] sm:$0xf]
  %v431 = vld [vmem:[%s5 + $0x14] sm:$0xf]
  %v432 = vld [vmem:[%s5 + $0x18] sm:$0xf]
  %v433 = vld [vmem:[%s5 + $0x1c] sm:$0xf]
  %v434 = vld [vmem:[%s6] sm:$0xff]
  %v435 = vld [vmem:[%s6 + $0x8] sm:$0xff]
  %v436 = vld [vmem:[%s6 + $0x10] sm:$0xff]
  %v437 = vld [vmem:[%s6 + $0x18] sm:$0xff]
  %v438 = vld [vmem:[%s6 + $0x20] sm:$0xff]
  %v439 = vld [vmem:[%s6 + $0x28] sm:$0xff]
  %v440 = vld [vmem:[%s6 + $0x30] sm:$0xff]
  %v441 = vld [vmem:[%s6 + $0x38] sm:$0xff]
  %443 = vset.pattern.permute.xlu0 0
  %444 = vperm.xlu0 %443, %v434
  %v445 = vpop.permute.xlu0 %444
  %448 = vset.pattern.permute.xlu0 0
  %449 = vperm.xlu0 %448, %v435
  %v450 = vpop.permute.xlu0 %449
  %453 = vset.pattern.permute.xlu0 0
  %454 = vperm.xlu0 %453, %v436
  %v455 = vpop.permute.xlu0 %454
  %458 = vset.pattern.permute.xlu0 0
  %459 = vperm.xlu0 %458, %v437
  %v460 = vpop.permute.xlu0 %459
  %463 = vset.pattern.permute.xlu0 0
  %464 = vperm.xlu0 %463, %v438
  %v465 = vpop.permute.xlu0 %464
  %468 = vset.pattern.permute.xlu0 0
  %469 = vperm.xlu0 %468, %v439
  %v470 = vpop.permute.xlu0 %469
  %473 = vset.pattern.permute.xlu0 0
  %474 = vperm.xlu0 %473, %v440
  %v475 = vpop.permute.xlu0 %474
  %478 = vset.pattern.permute.xlu0 0
  %479 = vperm.xlu0 %478, %v441
  %v480 = vpop.permute.xlu0 %479
  %v490 = vunpack.c.l.b16 %v426
  %v491 = vunpack.c.l.b16 %v427
  %v492 = vunpack.c.l.b16 %v428
  %v493 = vunpack.c.l.b16 %v429
  %v494 = vunpack.c.l.b16 %v430
  %v495 = vunpack.c.l.b16 %v431
  %v496 = vunpack.c.l.b16 %v432
  %v497 = vunpack.c.l.b16 %v433
  %v498 = vpack.c.b16 %v491, %v490
  %v499 = vpack.c.b16 %v493, %v492
  %v500 = vpack.c.b16 %v495, %v494
  %v501 = vpack.c.b16 %v497, %v496
  %vm502 = vcmask 523264
  %v504 = vsel %vm502, %v498, 0
  %v507 = vsel %vm502, %v499, 0
  %v510 = vsel %vm502, %v500, 0
  %v513 = vsel %vm502, %v501, 0
  %515 = vmatprep.subr.bf16.mxu0 %v419
  %516 = vmatpush1.bf16.msra.mxu0 %v418
  %517 = vmatprep.subr.bf16.mxu0 %v421
  %518 = vmatpush1.bf16.msra.mxu0 %v420
  %519 = vmatprep.subr.bf16.mxu0 %v423
  %520 = vmatpush1.bf16.msra.mxu0 %v422
  %521 = vmatprep.subr.bf16.mxu0 %v425
  %522 = vmatpush1.bf16.msra.mxu0 %v424
  %523 = vmatprep.subr.bf16.mxu0 0
  %524 = vmatpush1.bf16.msra.mxu0 0
  %525 = vmatprep.subr.bf16.mxu0 0
  %526 = vmatpush1.bf16.msra.mxu0 0
  %527 = vmatprep.subr.bf16.mxu0 0
  %528 = vmatpush1.bf16.msra.mxu0 0
  %529 = vmatprep.subr.bf16.mxu0 0
  %530 = vmatpush1.bf16.msra.mxu0 0
  %531 = vmatprep.subr.bf16.mxu0 0
  %532 = vmatpush1.bf16.msra.mxu0 0
  %533 = vmatprep.subr.bf16.mxu0 0
  %534 = vmatpush1.bf16.msra.mxu0 0
  %535 = vmatprep.subr.bf16.mxu0 0
  %536 = vmatpush1.bf16.msra.mxu0 0
  %537 = vmatprep.subr.bf16.mxu0 0
  %538 = vmatpush1.bf16.msra.mxu0 0
  %539 = vmatprep.subr.bf16.mxu0 0
  %540 = vmatpush1.bf16.msra.mxu0 0
  %541 = vmatprep.subr.bf16.mxu0 0
  %542 = vmatpush1.bf16.msra.mxu0 0
  %543 = vmatprep.subr.bf16.mxu0 0
  %544 = vmatpush1.bf16.msra.mxu0 0
  %545 = vmatprep.subr.bf16.mxu0 0
  %546 = vmatpush1.bf16.msra.mxu0 0
  %547 = vmatprep.mubr.bf16.mxu0 0
  %548 = vmatmul.mubr.bf16.gmra.mrb[0].mxu0 %v504
  %v549 = vpop.f32.mrb[0].mxu0
  %v550 = vadd.f32 %v445, %v549
  %v551 = vpop.f32.mrb[0].mxu0
  %v552 = vadd.f32 %v445, %v551
  %v553 = vpop.f32.mrb[0].mxu0
  %v554 = vadd.f32 %v450, %v553
  %v555 = vpop.f32.mrb[0].mxu0
  %v556 = vadd.f32 %v450, %v555
  %557 = vmatprep.mubr.bf16.mxu0 0
  %558 = vmatmul.mubr.bf16.gmra.mrb[0].mxu0 %v507
  %v559 = vpop.f32.mrb[0].mxu0
  %v560 = vadd.f32 %v455, %v559
  %v561 = vpop.f32.mrb[0].mxu0
  %v562 = vadd.f32 %v455, %v561
  %v563 = vpop.f32.mrb[0].mxu0
  %v564 = vadd.f32 %v460, %v563
  %v565 = vpop.f32.mrb[0].mxu0
  %v566 = vadd.f32 %v460, %v565
  %567 = vmatprep.mubr.bf16.mxu0 0
  %568 = vmatmul.mubr.bf16.gmra.mrb[0].mxu0 %v510
  %v569 = vpop.f32.mrb[0].mxu0
  %v570 = vadd.f32 %v465, %v569
  %v571 = vpop.f32.mrb[0].mxu0
  %v572 = vadd.f32 %v465, %v571
  %v573 = vpop.f32.mrb[0].mxu0
  %v574 = vadd.f32 %v470, %v573
  %v575 = vpop.f32.mrb[0].mxu0
  %v576 = vadd.f32 %v470, %v575
  %577 = vmatprep.mubr.bf16.mxu0 0
  %578 = vmatmul.mubr.bf16.gmra.mrb[0].mxu0 %v513
  %v579 = vpop.f32.mrb[0].mxu0
  %v580 = vadd.f32 %v475, %v579
  %v581 = vpop.f32.mrb[0].mxu0
  %v582 = vadd.f32 %v475, %v581
  %v583 = vpop.f32.mrb[0].mxu0
  %v584 = vadd.f32 %v480, %v583
  %v585 = vpop.f32.mrb[0].mxu0
  %v586 = vadd.f32 %v480, %v585
  %587 = vdwg.mxu0
  %vm588 = vcmp.gt.f32.partialorder %v550, 0.0
  %vm589 = vcmp.gt.f32.partialorder %v552, 0.0
  %vm590 = vcmp.gt.f32.partialorder %v554, 0.0
  %vm591 = vcmp.gt.f32.partialorder %v556, 0.0
  %vm592 = vcmp.gt.f32.partialorder %v560, 0.0
  %vm593 = vcmp.gt.f32.partialorder %v562, 0.0
  %vm594 = vcmp.gt.f32.partialorder %v564, 0.0
  %vm595 = vcmp.gt.f32.partialorder %v566, 0.0
  %vm596 = vcmp.gt.f32.partialorder %v570, 0.0
  %vm597 = vcmp.gt.f32.partialorder %v572, 0.0
  %vm598 = vcmp.gt.f32.partialorder %v574, 0.0
  %vm599 = vcmp.gt.f32.partialorder %v576, 0.0
  %vm600 = vcmp.gt.f32.partialorder %v580, 0.0
  %vm601 = vcmp.gt.f32.partialorder %v582, 0.0
  %vm602 = vcmp.gt.f32.partialorder %v584, 0.0
  %vm603 = vcmp.gt.f32.partialorder %v586, 0.0
  %v604 = vmul.f32 %v550, 0.01
  %v605 = vmul.f32 %v552, 0.01
  %v606 = vmul.f32 %v554, 0.01
  %v607 = vmul.f32 %v556, 0.01
  %v608 = vmul.f32 %v560, 0.01
  %v609 = vmul.f32 %v562, 0.01
  %v610 = vmul.f32 %v564, 0.01
  %v611 = vmul.f32 %v566, 0.01
  %v612 = vmul.f32 %v570, 0.01
  %v613 = vmul.f32 %v572, 0.01
  %v614 = vmul.f32 %v574, 0.01
  %v615 = vmul.f32 %v576, 0.01
  %v616 = vmul.f32 %v580, 0.01
  %v617 = vmul.f32 %v582, 0.01
  %v618 = vmul.f32 %v584, 0.01
  %v619 = vmul.f32 %v586, 0.01
  %v620 = vsel %vm588, %v550, %v604
  %v621 = vsel %vm589, %v552, %v605
  %v622 = vsel %vm590, %v554, %v606
  %v623 = vsel %vm591, %v556, %v607
  %v624 = vsel %vm592, %v560, %v608
  %v625 = vsel %vm593, %v562, %v609
  %v626 = vsel %vm594, %v564, %v610
  %v627 = vsel %vm595, %v566, %v611
  %v628 = vsel %vm596, %v570, %v612
  %v629 = vsel %vm597, %v572, %v613
  %v630 = vsel %vm598, %v574, %v614
  %v631 = vsel %vm599, %v576, %v615
  %v632 = vsel %vm600, %v580, %v616
  %v633 = vsel %vm601, %v582, %v617
  %v634 = vsel %vm602, %v584, %v618
  %v635 = vsel %vm603, %v586, %v619
  %v636 = vpack.c.bf16 %v622, %v620
  %v637 = vpack.c.bf16 %v623, %v621
  %v638 = vpack.c.bf16 %v626, %v624
  %v639 = vpack.c.bf16 %v627, %v625
  %v640 = vpack.c.bf16 %v630, %v628
  %v641 = vpack.c.bf16 %v631, %v629
  %v642 = vpack.c.bf16 %v634, %v632
  %v643 = vpack.c.bf16 %v635, %v633
  %v644 = vld [vmem:[%s7] sm:$0xf]
  %v645 = vld [vmem:[%s7 + $0x4] sm:$0xf]
  %v646 = vld [vmem:[%s7 + $0x8] sm:$0xf]
  %v647 = vld [vmem:[%s7 + $0xc] sm:$0xf]
  %v648 = vld [vmem:[%s7 + $0x10] sm:$0xf]
  %v649 = vld [vmem:[%s7 + $0x14] sm:$0xf]
  %v650 = vld [vmem:[%s7 + $0x18] sm:$0xf]
  %v651 = vld [vmem:[%s7 + $0x1c] sm:$0xf]
  %v652 = vld [vmem:[%s7 + $0x20] sm:$0xf]
  %v653 = vld [vmem:[%s7 + $0x24] sm:$0xf]
  %v654 = vld [vmem:[%s7 + $0x28] sm:$0xf]
  %v655 = vld [vmem:[%s7 + $0x2c] sm:$0xf]
  %v656 = vld [vmem:[%s7 + $0x30] sm:$0xf]
  %v657 = vld [vmem:[%s7 + $0x34] sm:$0xf]
  %v658 = vld [vmem:[%s7 + $0x38] sm:$0xf]
  %v659 = vld [vmem:[%s7 + $0x3c] sm:$0xf]
  %v660 = vld [vmem:[%s8] sm:$0xff]
  %v661 = vld [vmem:[%s8 + $0x8] sm:$0xff]
  %v662 = vld [vmem:[%s8 + $0x10] sm:$0xff]
  %v663 = vld [vmem:[%s8 + $0x18] sm:$0xff]
  %v664 = vld [vmem:[%s8 + $0x20] sm:$0xff]
  %v665 = vld [vmem:[%s8 + $0x28] sm:$0xff]
  %v666 = vld [vmem:[%s8 + $0x30] sm:$0xff]
  %v667 = vld [vmem:[%s8 + $0x38] sm:$0xff]
  %v668 = vld [vmem:[%s8 + $0x40] sm:$0xff]
  %v669 = vld [vmem:[%s8 + $0x48] sm:$0xff]
  %v670 = vld [vmem:[%s8 + $0x50] sm:$0xff]
  %v671 = vld [vmem:[%s8 + $0x58] sm:$0xff]
  %v672 = vld [vmem:[%s8 + $0x60] sm:$0xff]
  %v673 = vld [vmem:[%s8 + $0x68] sm:$0xff]
  %v674 = vld [vmem:[%s8 + $0x70] sm:$0xff]
  %v675 = vld [vmem:[%s8 + $0x78] sm:$0xff]
  %677 = vset.pattern.permute.xlu0 0
  %678 = vperm.xlu0 %677, %v660
  %v679 = vpop.permute.xlu0 %678
  %682 = vset.pattern.permute.xlu0 0
  %683 = vperm.xlu0 %682, %v661
  %v684 = vpop.permute.xlu0 %683
  %687 = vset.pattern.permute.xlu0 0
  %688 = vperm.xlu0 %687, %v662
  %v689 = vpop.permute.xlu0 %688
  %692 = vset.pattern.permute.xlu0 0
  %693 = vperm.xlu0 %692, %v663
  %v694 = vpop.permute.xlu0 %693
  %697 = vset.pattern.permute.xlu0 0
  %698 = vperm.xlu0 %697, %v664
  %v699 = vpop.permute.xlu0 %698
  %702 = vset.pattern.permute.xlu0 0
  %703 = vperm.xlu0 %702, %v665
  %v704 = vpop.permute.xlu0 %703
  %707 = vset.pattern.permute.xlu0 0
  %708 = vperm.xlu0 %707, %v666
  %v709 = vpop.permute.xlu0 %708
  %712 = vset.pattern.permute.xlu0 0
  %713 = vperm.xlu0 %712, %v667
  %v714 = vpop.permute.xlu0 %713
  %717 = vset.pattern.permute.xlu0 0
  %718 = vperm.xlu0 %717, %v668
  %v719 = vpop.permute.xlu0 %718
  %722 = vset.pattern.permute.xlu0 0
  %723 = vperm.xlu0 %722, %v669
  %v724 = vpop.permute.xlu0 %723
  %727 = vset.pattern.permute.xlu0 0
  %728 = vperm.xlu0 %727, %v670
  %v729 = vpop.permute.xlu0 %728
  %732 = vset.pattern.permute.xlu0 0
  %733 = vperm.xlu0 %732, %v671
  %v734 = vpop.permute.xlu0 %733
  %737 = vset.pattern.permute.xlu0 0
  %738 = vperm.xlu0 %737, %v672
  %v739 = vpop.permute.xlu0 %738
  %742 = vset.pattern.permute.xlu0 0
  %743 = vperm.xlu0 %742, %v673
  %v744 = vpop.permute.xlu0 %743
  %747 = vset.pattern.permute.xlu0 0
  %748 = vperm.xlu0 %747, %v674
  %v749 = vpop.permute.xlu0 %748
  %752 = vset.pattern.permute.xlu0 0
  %753 = vperm.xlu0 %752, %v675
  %v754 = vpop.permute.xlu0 %753
  %v772 = vunpack.c.l.b16 %v644
  %v773 = vunpack.c.l.b16 %v645
  %v774 = vunpack.c.l.b16 %v646
  %v775 = vunpack.c.l.b16 %v647
  %v776 = vunpack.c.l.b16 %v648
  %v777 = vunpack.c.l.b16 %v649
  %v778 = vunpack.c.l.b16 %v650
  %v779 = vunpack.c.l.b16 %v651
  %v780 = vunpack.c.l.b16 %v652
  %v781 = vunpack.c.l.b16 %v653
  %v782 = vunpack.c.l.b16 %v654
  %v783 = vunpack.c.l.b16 %v655
  %v784 = vunpack.c.l.b16 %v656
  %v785 = vunpack.c.l.b16 %v657
  %v786 = vunpack.c.l.b16 %v658
  %v787 = vunpack.c.l.b16 %v659
  %v788 = vpack.c.b16 %v773, %v772
  %v789 = vpack.c.b16 %v775, %v774
  %v790 = vpack.c.b16 %v777, %v776
  %v791 = vpack.c.b16 %v779, %v778
  %v792 = vpack.c.b16 %v781, %v780
  %v793 = vpack.c.b16 %v783, %v782
  %v794 = vpack.c.b16 %v785, %v784
  %v795 = vpack.c.b16 %v787, %v786
  %v797 = vsel %vm502, %v788, 0
  %v800 = vsel %vm502, %v789, 0
  %v803 = vsel %vm502, %v790, 0
  %v806 = vsel %vm502, %v791, 0
  %v809 = vsel %vm502, %v792, 0
  %v812 = vsel %vm502, %v793, 0
  %v815 = vsel %vm502, %v794, 0
  %v818 = vsel %vm502, %v795, 0
  %820 = vmatprep.subr.bf16.mxu0 %v637
  %821 = vmatpush1.bf16.msra.mxu0 %v636
  %822 = vmatprep.subr.bf16.mxu0 %v639
  %823 = vmatpush1.bf16.msra.mxu0 %v638
  %824 = vmatprep.subr.bf16.mxu0 %v641
  %825 = vmatpush1.bf16.msra.mxu0 %v640
  %826 = vmatprep.subr.bf16.mxu0 %v643
  %827 = vmatpush1.bf16.msra.mxu0 %v642
  %828 = vmatprep.subr.bf16.mxu0 0
  %829 = vmatpush1.bf16.msra.mxu0 0
  %830 = vmatprep.subr.bf16.mxu0 0
  %831 = vmatpush1.bf16.msra.mxu0 0
  %832 = vmatprep.subr.bf16.mxu0 0
  %833 = vmatpush1.bf16.msra.mxu0 0
  %834 = vmatprep.subr.bf16.mxu0 0
  %835 = vmatpush1.bf16.msra.mxu0 0
  %836 = vmatprep.subr.bf16.mxu0 0
  %837 = vmatpush1.bf16.msra.mxu0 0
  %838 = vmatprep.subr.bf16.mxu0 0
  %839 = vmatpush1.bf16.msra.mxu0 0
  %840 = vmatprep.subr.bf16.mxu0 0
  %841 = vmatpush1.bf16.msra.mxu0 0
  %842 = vmatprep.subr.bf16.mxu0 0
  %843 = vmatpush1.bf16.msra.mxu0 0
  %844 = vmatprep.subr.bf16.mxu0 0
  %845 = vmatpush1.bf16.msra.mxu0 0
  %846 = vmatprep.subr.bf16.mxu0 0
  %847 = vmatpush1.bf16.msra.mxu0 0
  %848 = vmatprep.subr.bf16.mxu0 0
  %849 = vmatpush1.bf16.msra.mxu0 0
  %850 = vmatprep.subr.bf16.mxu0 0
  %851 = vmatpush1.bf16.msra.mxu0 0
  %852 = vmatprep.mubr.bf16.mxu0 0
  %853 = vmatmul.mubr.bf16.gmra.mrb[0].mxu0 %v797
  %v854 = vpop.f32.mrb[0].mxu0
  %v855 = vadd.f32 %v679, %v854
  %v856 = vpop.f32.mrb[0].mxu0
  %v857 = vadd.f32 %v679, %v856
  %v858 = vpop.f32.mrb[0].mxu0
  %v859 = vadd.f32 %v684, %v858
  %v860 = vpop.f32.mrb[0].mxu0
  %v861 = vadd.f32 %v684, %v860
  %862 = vmatprep.mubr.bf16.mxu0 0
  %863 = vmatmul.mubr.bf16.gmra.mrb[0].mxu0 %v800
  %v864 = vpop.f32.mrb[0].mxu0
  %v865 = vadd.f32 %v689, %v864
  %v866 = vpop.f32.mrb[0].mxu0
  %v867 = vadd.f32 %v689, %v866
  %v868 = vpop.f32.mrb[0].mxu0
  %v869 = vadd.f32 %v694, %v868
  %v870 = vpop.f32.mrb[0].mxu0
  %v871 = vadd.f32 %v694, %v870
  %872 = vmatprep.mubr.bf16.mxu0 0
  %873 = vmatmul.mubr.bf16.gmra.mrb[0].mxu0 %v803
  %v874 = vpop.f32.mrb[0].mxu0
  %v875 = vadd.f32 %v699, %v874
  %v876 = vpop.f32.mrb[0].mxu0
  %v877 = vadd.f32 %v699, %v876
  %v878 = vpop.f32.mrb[0].mxu0
  %v879 = vadd.f32 %v704, %v878
  %v880 = vpop.f32.mrb[0].mxu0
  %v881 = vadd.f32 %v704, %v880
  %882 = vmatprep.mubr.bf16.mxu0 0
  %883 = vmatmul.mubr.bf16.gmra.mrb[0].mxu0 %v806
  %v884 = vpop.f32.mrb[0].mxu0
  %v885 = vadd.f32 %v709, %v884
  %v886 = vpop.f32.mrb[0].mxu0
  %v887 = vadd.f32 %v709, %v886
  %v888 = vpop.f32.mrb[0].mxu0
  %v889 = vadd.f32 %v714, %v888
  %v890 = vpop.f32.mrb[0].mxu0
  %v891 = vadd.f32 %v714, %v890
  %892 = vmatprep.mubr.bf16.mxu0 0
  %893 = vmatmul.mubr.bf16.gmra.mrb[0].mxu0 %v809
  %v894 = vpop.f32.mrb[0].mxu0
  %v895 = vadd.f32 %v719, %v894
  %v896 = vpop.f32.mrb[0].mxu0
  %v897 = vadd.f32 %v719, %v896
  %v898 = vpop.f32.mrb[0].mxu0
  %v899 = vadd.f32 %v724, %v898
  %v900 = vpop.f32.mrb[0].mxu0
  %v901 = vadd.f32 %v724, %v900
  %902 = vmatprep.mubr.bf16.mxu0 0
  %903 = vmatmul.mubr.bf16.gmra.mrb[0].mxu0 %v812
  %v904 = vpop.f32.mrb[0].mxu0
  %v905 = vadd.f32 %v729, %v904
  %v906 = vpop.f32.mrb[0].mxu0
  %v907 = vadd.f32 %v729, %v906
  %v908 = vpop.f32.mrb[0].mxu0
  %v909 = vadd.f32 %v734, %v908
  %v910 = vpop.f32.mrb[0].mxu0
  %v911 = vadd.f32 %v734, %v910
  %912 = vmatprep.mubr.bf16.mxu0 0
  %913 = vmatmul.mubr.bf16.gmra.mrb[0].mxu0 %v815
  %v914 = vpop.f32.mrb[0].mxu0
  %v915 = vadd.f32 %v739, %v914
  %v916 = vpop.f32.mrb[0].mxu0
  %v917 = vadd.f32 %v739, %v916
  %v918 = vpop.f32.mrb[0].mxu0
  %v919 = vadd.f32 %v744, %v918
  %v920 = vpop.f32.mrb[0].mxu0
  %v921 = vadd.f32 %v744, %v920
  %922 = vmatprep.mubr.bf16.mxu0 0
  %923 = vmatmul.mubr.bf16.gmra.mrb[0].mxu0 %v818
  %v924 = vpop.f32.mrb[0].mxu0
  %v925 = vadd.f32 %v749, %v924
  %v926 = vpop.f32.mrb[0].mxu0
  %v927 = vadd.f32 %v749, %v926
  %v928 = vpop.f32.mrb[0].mxu0
  %v929 = vadd.f32 %v754, %v928
  %v930 = vpop.f32.mrb[0].mxu0
  %v931 = vadd.f32 %v754, %v930
  %932 = vdwg.mxu0
  %vm933 = vcmp.gt.f32.partialorder %v855, 0.0
  %vm934 = vcmp.gt.f32.partialorder %v857, 0.0
  %vm935 = vcmp.gt.f32.partialorder %v859, 0.0
  %vm936 = vcmp.gt.f32.partialorder %v861, 0.0
  %vm937 = vcmp.gt.f32.partialorder %v865, 0.0
  %vm938 = vcmp.gt.f32.partialorder %v867, 0.0
  %vm939 = vcmp.gt.f32.partialorder %v869, 0.0
  %vm940 = vcmp.gt.f32.partialorder %v871, 0.0
  %vm941 = vcmp.gt.f32.partialorder %v875, 0.0
  %vm942 = vcmp.gt.f32.partialorder %v877, 0.0
  %vm943 = vcmp.gt.f32.partialorder %v879, 0.0
  %vm944 = vcmp.gt.f32.partialorder %v881, 0.0
  %vm945 = vcmp.gt.f32.partialorder %v885, 0.0
  %vm946 = vcmp.gt.f32.partialorder %v887, 0.0
  %vm947 = vcmp.gt.f32.partialorder %v889, 0.0
  %vm948 = vcmp.gt.f32.partialorder %v891, 0.0
  %vm949 = vcmp.gt.f32.partialorder %v895, 0.0
  %vm950 = vcmp.gt.f32.partialorder %v897, 0.0
  %vm951 = vcmp.gt.f32.partialorder %v899, 0.0
  %vm952 = vcmp.gt.f32.partialorder %v901, 0.0
  %vm953 = vcmp.gt.f32.partialorder %v905, 0.0
  %vm954 = vcmp.gt.f32.partialorder %v907, 0.0
  %vm955 = vcmp.gt.f32.partialorder %v909, 0.0
  %vm956 = vcmp.gt.f32.partialorder %v911, 0.0
  %vm957 = vcmp.gt.f32.partialorder %v915, 0.0
  %vm958 = vcmp.gt.f32.partialorder %v917, 0.0
  %vm959 = vcmp.gt.f32.partialorder %v919, 0.0
  %vm960 = vcmp.gt.f32.partialorder %v921, 0.0
  %vm961 = vcmp.gt.f32.partialorder %v925, 0.0
  %vm962 = vcmp.gt.f32.partialorder %v927, 0.0
  %vm963 = vcmp.gt.f32.partialorder %v929, 0.0
  %vm964 = vcmp.gt.f32.partialorder %v931, 0.0
  %v965 = vmul.f32 %v855, 0.01
  %v966 = vmul.f32 %v857, 0.01
  %v967 = vmul.f32 %v859, 0.01
  %v968 = vmul.f32 %v861, 0.01
  %v969 = vmul.f32 %v865, 0.01
  %v970 = vmul.f32 %v867, 0.01
  %v971 = vmul.f32 %v869, 0.01
  %v972 = vmul.f32 %v871, 0.01
  %v973 = vmul.f32 %v875, 0.01
  %v974 = vmul.f32 %v877, 0.01
  %v975 = vmul.f32 %v879, 0.01
  %v976 = vmul.f32 %v881, 0.01
  %v977 = vmul.f32 %v885, 0.01
  %v978 = vmul.f32 %v887, 0.01
  %v979 = vmul.f32 %v889, 0.01
  %v980 = vmul.f32 %v891, 0.01
  %v981 = vmul.f32 %v895, 0.01
  %v982 = vmul.f32 %v897, 0.01
  %v983 = vmul.f32 %v899, 0.01
  %v984 = vmul.f32 %v901, 0.01
  %v985 = vmul.f32 %v905, 0.01
  %v986 = vmul.f32 %v907, 0.01
  %v987 = vmul.f32 %v909, 0.01
  %v988 = vmul.f32 %v911, 0.01
  %v989 = vmul.f32 %v915, 0.01
  %v990 = vmul.f32 %v917, 0.01
  %v991 = vmul.f32 %v919, 0.01
  %v992 = vmul.f32 %v921, 0.01
  %v993 = vmul.f32 %v925, 0.01
  %v994 = vmul.f32 %v927, 0.01
  %v995 = vmul.f32 %v929, 0.01
  %v996 = vmul.f32 %v931, 0.01
  %v997 = vsel %vm933, %v855, %v965
  %v998 = vsel %vm934, %v857, %v966
  %v999 = vsel %vm935, %v859, %v967
  %v1000 = vsel %vm936, %v861, %v968
  %v1001 = vsel %vm937, %v865, %v969
  %v1002 = vsel %vm938, %v867, %v970
  %v1003 = vsel %vm939, %v869, %v971
  %v1004 = vsel %vm940, %v871, %v972
  %v1005 = vsel %vm941, %v875, %v973
  %v1006 = vsel %vm942, %v877, %v974
  %v1007 = vsel %vm943, %v879, %v975
  %v1008 = vsel %vm944, %v881, %v976
  %v1009 = vsel %vm945, %v885, %v977
  %v1010 = vsel %vm946, %v887, %v978
  %v1011 = vsel %vm947, %v889, %v979
  %v1012 = vsel %vm948, %v891, %v980
  %v1013 = vsel %vm949, %v895, %v981
  %v1014 = vsel %vm950, %v897, %v982
  %v1015 = vsel %vm951, %v899, %v983
  %v1016 = vsel %vm952, %v901, %v984
  %v1017 = vsel %vm953, %v905, %v985
  %v1018 = vsel %vm954, %v907, %v986
  %v1019 = vsel %vm955, %v909, %v987
  %v1020 = vsel %vm956, %v911, %v988
  %v1021 = vsel %vm957, %v915, %v989
  %v1022 = vsel %vm958, %v917, %v990
  %v1023 = vsel %vm959, %v919, %v991
  %v1024 = vsel %vm960, %v921, %v992
  %v1025 = vsel %vm961, %v925, %v993
  %v1026 = vsel %vm962, %v927, %v994
  %v1027 = vsel %vm963, %v929, %v995
  %v1028 = vsel %vm964, %v931, %v996
  %v1029 = vpack.c.bf16 %v999, %v997
  %v1030 = vpack.c.bf16 %v1000, %v998
  %v1031 = vpack.c.bf16 %v1003, %v1001
  %v1032 = vpack.c.bf16 %v1004, %v1002
  %v1033 = vpack.c.bf16 %v1007, %v1005
  %v1034 = vpack.c.bf16 %v1008, %v1006
  %v1035 = vpack.c.bf16 %v1011, %v1009
  %v1036 = vpack.c.bf16 %v1012, %v1010
  %v1037 = vpack.c.bf16 %v1015, %v1013
  %v1038 = vpack.c.bf16 %v1016, %v1014
  %v1039 = vpack.c.bf16 %v1019, %v1017
  %v1040 = vpack.c.bf16 %v1020, %v1018
  %v1041 = vpack.c.bf16 %v1023, %v1021
  %v1042 = vpack.c.bf16 %v1024, %v1022
  %v1043 = vpack.c.bf16 %v1027, %v1025
  %v1044 = vpack.c.bf16 %v1028, %v1026
  %v1045 = vld [vmem:[%s9] sm:$0xf]
  %v1046 = vld [vmem:[%s9 + $0x4] sm:$0xf]
  %v1047 = vld [vmem:[%s9 + $0x8] sm:$0xf]
  %v1048 = vld [vmem:[%s9 + $0xc] sm:$0xf]
  %v1049 = vld [vmem:[%s9 + $0x10] sm:$0xf]
  %v1050 = vld [vmem:[%s9 + $0x14] sm:$0xf]
  %v1051 = vld [vmem:[%s9 + $0x18] sm:$0xf]
  %v1052 = vld [vmem:[%s9 + $0x1c] sm:$0xf]
  %v1053 = vld [vmem:[%s10] sm:$0xff]
  %v1054 = vld [vmem:[%s10 + $0x8] sm:$0xff]
  %v1055 = vld [vmem:[%s10 + $0x10] sm:$0xff]
  %v1056 = vld [vmem:[%s10 + $0x18] sm:$0xff]
  %v1057 = vld [vmem:[%s10 + $0x20] sm:$0xff]
  %v1058 = vld [vmem:[%s10 + $0x28] sm:$0xff]
  %v1059 = vld [vmem:[%s10 + $0x30] sm:$0xff]
  %v1060 = vld [vmem:[%s10 + $0x38] sm:$0xff]
  %1062 = vset.pattern.permute.xlu0 0
  %1063 = vperm.xlu0 %1062, %v1053
  %v1064 = vpop.permute.xlu0 %1063
  %1067 = vset.pattern.permute.xlu0 0
  %1068 = vperm.xlu0 %1067, %v1054
  %v1069 = vpop.permute.xlu0 %1068
  %1072 = vset.pattern.permute.xlu0 0
  %1073 = vperm.xlu0 %1072, %v1055
  %v1074 = vpop.permute.xlu0 %1073
  %1077 = vset.pattern.permute.xlu0 0
  %1078 = vperm.xlu0 %1077, %v1056
  %v1079 = vpop.permute.xlu0 %1078
  %1082 = vset.pattern.permute.xlu0 0
  %1083 = vperm.xlu0 %1082, %v1057
  %v1084 = vpop.permute.xlu0 %1083
  %1087 = vset.pattern.permute.xlu0 0
  %1088 = vperm.xlu0 %1087, %v1058
  %v1089 = vpop.permute.xlu0 %1088
  %1092 = vset.pattern.permute.xlu0 0
  %1093 = vperm.xlu0 %1092, %v1059
  %v1094 = vpop.permute.xlu0 %1093
  %1097 = vset.pattern.permute.xlu0 0
  %1098 = vperm.xlu0 %1097, %v1060
  %v1099 = vpop.permute.xlu0 %1098
  %v1109 = vunpack.c.l.b16 %v1045
  %v1110 = vunpack.c.l.b16 %v1046
  %v1111 = vunpack.c.l.b16 %v1047
  %v1112 = vunpack.c.l.b16 %v1048
  %v1113 = vunpack.c.l.b16 %v1049
  %v1114 = vunpack.c.l.b16 %v1050
  %v1115 = vunpack.c.l.b16 %v1051
  %v1116 = vunpack.c.l.b16 %v1052
  %v1117 = vpack.c.b16 %v1110, %v1109
  %v1118 = vpack.c.b16 %v1112, %v1111
  %v1119 = vpack.c.b16 %v1114, %v1113
  %v1120 = vpack.c.b16 %v1116, %v1115
  %1125 = vmatprep.subr.bf16.mxu0 %v1030
  %1126 = vmatpush1.bf16.msra.mxu0 %v1029
  %1127 = vmatprep.subr.bf16.mxu0 %v1032
  %1128 = vmatpush1.bf16.msra.mxu0 %v1031
  %1129 = vmatprep.subr.bf16.mxu0 %v1034
  %1130 = vmatpush1.bf16.msra.mxu0 %v1033
  %1131 = vmatprep.subr.bf16.mxu0 %v1036
  %1132 = vmatpush1.bf16.msra.mxu0 %v1035
  %1133 = vmatprep.subr.bf16.mxu0 %v1038
  %1134 = vmatpush1.bf16.msra.mxu0 %v1037
  %1135 = vmatprep.subr.bf16.mxu0 %v1040
  %1136 = vmatpush1.bf16.msra.mxu0 %v1039
  %1137 = vmatprep.subr.bf16.mxu0 %v1042
  %1138 = vmatpush1.bf16.msra.mxu0 %v1041
  %1139 = vmatprep.subr.bf16.mxu0 %v1044
  %1140 = vmatpush1.bf16.msra.mxu0 %v1043
  %1141 = vmatprep.subr.bf16.mxu0 0
  %1142 = vmatpush1.bf16.msra.mxu0 0
  %1143 = vmatprep.subr.bf16.mxu0 0
  %1144 = vmatpush1.bf16.msra.mxu0 0
  %1145 = vmatprep.subr.bf16.mxu0 0
  %1146 = vmatpush1.bf16.msra.mxu0 0
  %1147 = vmatprep.subr.bf16.mxu0 0
  %1148 = vmatpush1.bf16.msra.mxu0 0
  %1149 = vmatprep.subr.bf16.mxu0 0
  %1150 = vmatpush1.bf16.msra.mxu0 0
  %1151 = vmatprep.subr.bf16.mxu0 0
  %1152 = vmatpush1.bf16.msra.mxu0 0
  %1153 = vmatprep.subr.bf16.mxu0 0
  %1154 = vmatpush1.bf16.msra.mxu0 0
  %1155 = vmatprep.subr.bf16.mxu0 0
  %1156 = vmatpush1.bf16.msra.mxu0 0
  %1157 = vmatprep.mubr.bf16.mxu0 0
  %1158 = vmatmul.mubr.bf16.gmra.mrb[0].mxu0 %v1117
  %v1159 = vpop.f32.mrb[0].mxu0
  %v1160 = vadd.f32 %v1064, %v1159
  %v1161 = vpop.f32.mrb[0].mxu0
  %v1162 = vadd.f32 %v1064, %v1161
  %v1163 = vpop.f32.mrb[0].mxu0
  %v1164 = vadd.f32 %v1069, %v1163
  %v1165 = vpop.f32.mrb[0].mxu0
  %v1166 = vadd.f32 %v1069, %v1165
  %1167 = vmatprep.mubr.bf16.mxu0 0
  %1168 = vmatmul.mubr.bf16.gmra.mrb[0].mxu0 %v1118
  %v1169 = vpop.f32.mrb[0].mxu0
  %v1170 = vadd.f32 %v1074, %v1169
  %v1171 = vpop.f32.mrb[0].mxu0
  %v1172 = vadd.f32 %v1074, %v1171
  %v1173 = vpop.f32.mrb[0].mxu0
  %v1174 = vadd.f32 %v1079, %v1173
  %v1175 = vpop.f32.mrb[0].mxu0
  %v1176 = vadd.f32 %v1079, %v1175
  %1177 = vmatprep.mubr.bf16.mxu0 0
  %1178 = vmatmul.mubr.bf16.gmra.mrb[0].mxu0 %v1119
  %v1179 = vpop.f32.mrb[0].mxu0
  %v1180 = vadd.f32 %v1084, %v1179
  %v1181 = vpop.f32.mrb[0].mxu0
  %v1182 = vadd.f32 %v1084, %v1181
  %v1183 = vpop.f32.mrb[0].mxu0
  %v1184 = vadd.f32 %v1089, %v1183
  %v1185 = vpop.f32.mrb[0].mxu0
  %v1186 = vadd.f32 %v1089, %v1185
  %1187 = vmatprep.mubr.bf16.mxu0 0
  %1188 = vmatmul.mubr.bf16.gmra.mrb[0].mxu0 %v1120
  %v1189 = vpop.f32.mrb[0].mxu0
  %v1190 = vadd.f32 %v1094, %v1189
  %v1191 = vpop.f32.mrb[0].mxu0
  %v1192 = vadd.f32 %v1094, %v1191
  %v1193 = vpop.f32.mrb[0].mxu0
  %v1194 = vadd.f32 %v1099, %v1193
  %v1195 = vpop.f32.mrb[0].mxu0
  %v1196 = vadd.f32 %v1099, %v1195
  %1197 = vdwg.mxu0
  %vm1198 = vcmp.gt.f32.partialorder %v1160, 0.0
  %vm1199 = vcmp.gt.f32.partialorder %v1162, 0.0
  %vm1200 = vcmp.gt.f32.partialorder %v1164, 0.0
  %vm1201 = vcmp.gt.f32.partialorder %v1166, 0.0
  %vm1202 = vcmp.gt.f32.partialorder %v1170, 0.0
  %vm1203 = vcmp.gt.f32.partialorder %v1172, 0.0
  %vm1204 = vcmp.gt.f32.partialorder %v1174, 0.0
  %vm1205 = vcmp.gt.f32.partialorder %v1176, 0.0
  %vm1206 = vcmp.gt.f32.partialorder %v1180, 0.0
  %vm1207 = vcmp.gt.f32.partialorder %v1182, 0.0
  %vm1208 = vcmp.gt.f32.partialorder %v1184, 0.0
  %vm1209 = vcmp.gt.f32.partialorder %v1186, 0.0
  %vm1210 = vcmp.gt.f32.partialorder %v1190, 0.0
  %vm1211 = vcmp.gt.f32.partialorder %v1192, 0.0
  %vm1212 = vcmp.gt.f32.partialorder %v1194, 0.0
  %vm1213 = vcmp.gt.f32.partialorder %v1196, 0.0
  %v1214 = vmul.f32 %v1160, 0.01
  %v1215 = vmul.f32 %v1162, 0.01
  %v1216 = vmul.f32 %v1164, 0.01
  %v1217 = vmul.f32 %v1166, 0.01
  %v1218 = vmul.f32 %v1170, 0.01
  %v1219 = vmul.f32 %v1172, 0.01
  %v1220 = vmul.f32 %v1174, 0.01
  %v1221 = vmul.f32 %v1176, 0.01
  %v1222 = vmul.f32 %v1180, 0.01
  %v1223 = vmul.f32 %v1182, 0.01
  %v1224 = vmul.f32 %v1184, 0.01
  %v1225 = vmul.f32 %v1186, 0.01
  %v1226 = vmul.f32 %v1190, 0.01
  %v1227 = vmul.f32 %v1192, 0.01
  %v1228 = vmul.f32 %v1194, 0.01
  %v1229 = vmul.f32 %v1196, 0.01
  %v1230 = vsel %vm1198, %v1160, %v1214
  %v1231 = vsel %vm1199, %v1162, %v1215
  %v1232 = vsel %vm1200, %v1164, %v1216
  %v1233 = vsel %vm1201, %v1166, %v1217
  %v1234 = vsel %vm1202, %v1170, %v1218
  %v1235 = vsel %vm1203, %v1172, %v1219
  %v1236 = vsel %vm1204, %v1174, %v1220
  %v1237 = vsel %vm1205, %v1176, %v1221
  %v1238 = vsel %vm1206, %v1180, %v1222
  %v1239 = vsel %vm1207, %v1182, %v1223
  %v1240 = vsel %vm1208, %v1184, %v1224
  %v1241 = vsel %vm1209, %v1186, %v1225
  %v1242 = vsel %vm1210, %v1190, %v1226
  %v1243 = vsel %vm1211, %v1192, %v1227
  %v1244 = vsel %vm1212, %v1194, %v1228
  %v1245 = vsel %vm1213, %v1196, %v1229
  %v1246 = vpack.c.bf16 %v1232, %v1230
  %v1247 = vpack.c.bf16 %v1233, %v1231
  %v1248 = vpack.c.bf16 %v1236, %v1234
  %v1249 = vpack.c.bf16 %v1237, %v1235
  %v1250 = vpack.c.bf16 %v1240, %v1238
  %v1251 = vpack.c.bf16 %v1241, %v1239
  %v1252 = vpack.c.bf16 %v1244, %v1242
  %v1253 = vpack.c.bf16 %v1245, %v1243
  %v1254 = vld [vmem:[%s11] sm:$0xf]
  %v1255 = vld [vmem:[%s11 + $0x4] sm:$0xf]
  %v1256 = vld [vmem:[%s11 + $0x8] sm:$0xf]
  %v1257 = vld [vmem:[%s11 + $0xc] sm:$0xf]
  %v1258 = vld [vmem:[%s11 + $0x10] sm:$0xf]
  %v1259 = vld [vmem:[%s11 + $0x14] sm:$0xf]
  %v1260 = vld [vmem:[%s11 + $0x18] sm:$0xf]
  %v1261 = vld [vmem:[%s11 + $0x1c] sm:$0xf]
  %v1262 = vld [vmem:[%s12] sm:$0xff]
  %v1263 = vld [vmem:[%s12 + $0x8] sm:$0xff]
  %v1264 = vld [vmem:[%s12 + $0x10] sm:$0xff]
  %v1265 = vld [vmem:[%s12 + $0x18] sm:$0xff]
  %v1266 = vld [vmem:[%s12 + $0x20] sm:$0xff]
  %v1267 = vld [vmem:[%s12 + $0x28] sm:$0xff]
  %v1268 = vld [vmem:[%s12 + $0x30] sm:$0xff]
  %v1269 = vld [vmem:[%s12 + $0x38] sm:$0xff]
  %1271 = vset.pattern.permute.xlu0 0
  %1272 = vperm.xlu0 %1271, %v1262
  %v1273 = vpop.permute.xlu0 %1272
  %1276 = vset.pattern.permute.xlu0 0
  %1277 = vperm.xlu0 %1276, %v1263
  %v1278 = vpop.permute.xlu0 %1277
  %1281 = vset.pattern.permute.xlu0 0
  %1282 = vperm.xlu0 %1281, %v1264
  %v1283 = vpop.permute.xlu0 %1282
  %1286 = vset.pattern.permute.xlu0 0
  %1287 = vperm.xlu0 %1286, %v1265
  %v1288 = vpop.permute.xlu0 %1287
  %1291 = vset.pattern.permute.xlu0 0
  %1292 = vperm.xlu0 %1291, %v1266
  %v1293 = vpop.permute.xlu0 %1292
  %1296 = vset.pattern.permute.xlu0 0
  %1297 = vperm.xlu0 %1296, %v1267
  %v1298 = vpop.permute.xlu0 %1297
  %1301 = vset.pattern.permute.xlu0 0
  %1302 = vperm.xlu0 %1301, %v1268
  %v1303 = vpop.permute.xlu0 %1302
  %1306 = vset.pattern.permute.xlu0 0
  %1307 = vperm.xlu0 %1306, %v1269
  %v1308 = vpop.permute.xlu0 %1307
  %v1318 = vunpack.c.l.b16 %v1254
  %v1319 = vunpack.c.l.b16 %v1255
  %v1320 = vunpack.c.l.b16 %v1256
  %v1321 = vunpack.c.l.b16 %v1257
  %v1322 = vunpack.c.l.b16 %v1258
  %v1323 = vunpack.c.l.b16 %v1259
  %v1324 = vunpack.c.l.b16 %v1260
  %v1325 = vunpack.c.l.b16 %v1261
  %v1326 = vpack.c.b16 %v1319, %v1318
  %v1327 = vpack.c.b16 %v1321, %v1320
  %v1328 = vpack.c.b16 %v1323, %v1322
  %v1329 = vpack.c.b16 %v1325, %v1324
  %v1331 = vsel %vm502, %v1326, 0
  %v1334 = vsel %vm502, %v1327, 0
  %v1337 = vsel %vm502, %v1328, 0
  %v1340 = vsel %vm502, %v1329, 0
  %1342 = vmatprep.subr.bf16.mxu0 %v1247
  %1343 = vmatpush1.bf16.msra.mxu0 %v1246
  %1344 = vmatprep.subr.bf16.mxu0 %v1249
  %1345 = vmatpush1.bf16.msra.mxu0 %v1248
  %1346 = vmatprep.subr.bf16.mxu0 %v1251
  %1347 = vmatpush1.bf16.msra.mxu0 %v1250
  %1348 = vmatprep.subr.bf16.mxu0 %v1253
  %1349 = vmatpush1.bf16.msra.mxu0 %v1252
  %1350 = vmatprep.subr.bf16.mxu0 0
  %1351 = vmatpush1.bf16.msra.mxu0 0
  %1352 = vmatprep.subr.bf16.mxu0 0
  %1353 = vmatpush1.bf16.msra.mxu0 0
  %1354 = vmatprep.subr.bf16.mxu0 0
  %1355 = vmatpush1.bf16.msra.mxu0 0
  %1356 = vmatprep.subr.bf16.mxu0 0
  %1357 = vmatpush1.bf16.msra.mxu0 0
  %1358 = vmatprep.subr.bf16.mxu0 0
  %1359 = vmatpush1.bf16.msra.mxu0 0
  %1360 = vmatprep.subr.bf16.mxu0 0
  %1361 = vmatpush1.bf16.msra.mxu0 0
  %1362 = vmatprep.subr.bf16.mxu0 0
  %1363 = vmatpush1.bf16.msra.mxu0 0
  %1364 = vmatprep.subr.bf16.mxu0 0
  %1365 = vmatpush1.bf16.msra.mxu0 0
  %1366 = vmatprep.subr.bf16.mxu0 0
  %1367 = vmatpush1.bf16.msra.mxu0 0
  %1368 = vmatprep.subr.bf16.mxu0 0
  %1369 = vmatpush1.bf16.msra.mxu0 0
  %1370 = vmatprep.subr.bf16.mxu0 0
  %1371 = vmatpush1.bf16.msra.mxu0 0
  %1372 = vmatprep.subr.bf16.mxu0 0
  %1373 = vmatpush1.bf16.msra.mxu0 0
  %1374 = vmatprep.mubr.bf16.mxu0 0
  %1375 = vmatmul.mubr.bf16.gmra.mrb[0].mxu0 %v1331
  %v1376 = vpop.f32.mrb[0].mxu0
  %v1377 = vadd.f32 %v1273, %v1376
  %v1378 = vpop.f32.mrb[0].mxu0
  %v1379 = vadd.f32 %v1273, %v1378
  %v1380 = vpop.f32.mrb[0].mxu0
  %v1381 = vadd.f32 %v1278, %v1380
  %v1382 = vpop.f32.mrb[0].mxu0
  %v1383 = vadd.f32 %v1278, %v1382
  %1384 = vmatprep.mubr.bf16.mxu0 0
  %1385 = vmatmul.mubr.bf16.gmra.mrb[0].mxu0 %v1334
  %v1386 = vpop.f32.mrb[0].mxu0
  %v1387 = vadd.f32 %v1283, %v1386
  %v1388 = vpop.f32.mrb[0].mxu0
  %v1389 = vadd.f32 %v1283, %v1388
  %v1390 = vpop.f32.mrb[0].mxu0
  %v1391 = vadd.f32 %v1288, %v1390
  %v1392 = vpop.f32.mrb[0].mxu0
  %v1393 = vadd.f32 %v1288, %v1392
  %1394 = vmatprep.mubr.bf16.mxu0 0
  %1395 = vmatmul.mubr.bf16.gmra.mrb[0].mxu0 %v1337
  %v1396 = vpop.f32.mrb[0].mxu0
  %v1397 = vadd.f32 %v1293, %v1396
  %v1398 = vpop.f32.mrb[0].mxu0
  %v1399 = vadd.f32 %v1293, %v1398
  %v1400 = vpop.f32.mrb[0].mxu0
  %v1401 = vadd.f32 %v1298, %v1400
  %v1402 = vpop.f32.mrb[0].mxu0
  %v1403 = vadd.f32 %v1298, %v1402
  %1404 = vmatprep.mubr.bf16.mxu0 0
  %1405 = vmatmul.mubr.bf16.gmra.mrb[0].mxu0 %v1340
  %v1406 = vpop.f32.mrb[0].mxu0
  %v1407 = vadd.f32 %v1303, %v1406
  %v1408 = vpop.f32.mrb[0].mxu0
  %v1409 = vadd.f32 %v1303, %v1408
  %v1410 = vpop.f32.mrb[0].mxu0
  %v1411 = vadd.f32 %v1308, %v1410
  %v1412 = vpop.f32.mrb[0].mxu0
  %v1413 = vadd.f32 %v1308, %v1412
  %1414 = vdwg.mxu0
  %vm1415 = vcmp.gt.f32.partialorder %v1377, 0.0
  %vm1416 = vcmp.gt.f32.partialorder %v1379, 0.0
  %vm1417 = vcmp.gt.f32.partialorder %v1381, 0.0
  %vm1418 = vcmp.gt.f32.partialorder %v1383, 0.0
  %vm1419 = vcmp.gt.f32.partialorder %v1387, 0.0
  %vm1420 = vcmp.gt.f32.partialorder %v1389, 0.0
  %vm1421 = vcmp.gt.f32.partialorder %v1391, 0.0
  %vm1422 = vcmp.gt.f32.partialorder %v1393, 0.0
  %vm1423 = vcmp.gt.f32.partialorder %v1397, 0.0
  %vm1424 = vcmp.gt.f32.partialorder %v1399, 0.0
  %vm1425 = vcmp.gt.f32.partialorder %v1401, 0.0
  %vm1426 = vcmp.gt.f32.partialorder %v1403, 0.0
  %vm1427 = vcmp.gt.f32.partialorder %v1407, 0.0
  %vm1428 = vcmp.gt.f32.partialorder %v1409, 0.0
  %vm1429 = vcmp.gt.f32.partialorder %v1411, 0.0
  %vm1430 = vcmp.gt.f32.partialorder %v1413, 0.0
  %v1431 = vmul.f32 %v1377, 0.01
  %v1432 = vmul.f32 %v1379, 0.01
  %v1433 = vmul.f32 %v1381, 0.01
  %v1434 = vmul.f32 %v1383, 0.01
  %v1435 = vmul.f32 %v1387, 0.01
  %v1436 = vmul.f32 %v1389, 0.01
  %v1437 = vmul.f32 %v1391, 0.01
  %v1438 = vmul.f32 %v1393, 0.01
  %v1439 = vmul.f32 %v1397, 0.01
  %v1440 = vmul.f32 %v1399, 0.01
  %v1441 = vmul.f32 %v1401, 0.01
  %v1442 = vmul.f32 %v1403, 0.01
  %v1443 = vmul.f32 %v1407, 0.01
  %v1444 = vmul.f32 %v1409, 0.01
  %v1445 = vmul.f32 %v1411, 0.01
  %v1446 = vmul.f32 %v1413, 0.01
  %v1447 = vsel %vm1415, %v1377, %v1431
  %v1448 = vsel %vm1416, %v1379, %v1432
  %v1449 = vsel %vm1417, %v1381, %v1433
  %v1450 = vsel %vm1418, %v1383, %v1434
  %v1451 = vsel %vm1419, %v1387, %v1435
  %v1452 = vsel %vm1420, %v1389, %v1436
  %v1453 = vsel %vm1421, %v1391, %v1437
  %v1454 = vsel %vm1422, %v1393, %v1438
  %v1455 = vsel %vm1423, %v1397, %v1439
  %v1456 = vsel %vm1424, %v1399, %v1440
  %v1457 = vsel %vm1425, %v1401, %v1441
  %v1458 = vsel %vm1426, %v1403, %v1442
  %v1459 = vsel %vm1427, %v1407, %v1443
  %v1460 = vsel %vm1428, %v1409, %v1444
  %v1461 = vsel %vm1429, %v1411, %v1445
  %v1462 = vsel %vm1430, %v1413, %v1446
  %v1463 = vpack.c.bf16 %v1449, %v1447
  %v1464 = vpack.c.bf16 %v1450, %v1448
  %v1465 = vpack.c.bf16 %v1453, %v1451
  %v1466 = vpack.c.bf16 %v1454, %v1452
  %v1467 = vpack.c.bf16 %v1457, %v1455
  %v1468 = vpack.c.bf16 %v1458, %v1456
  %v1469 = vpack.c.bf16 %v1461, %v1459
  %v1470 = vpack.c.bf16 %v1462, %v1460
  %v1471 = vld [vmem:[%s13] sm:$0xf]
  %v1472 = vld [vmem:[%s13 + $0x4] sm:$0xf]
  %v1473 = vld [vmem:[%s14] sm:$0xff]
  %v1474 = vld [vmem:[%s14 + $0x8] sm:$0xff]
  %1476 = vset.pattern.permute.xlu0 0
  %1477 = vperm.xlu0 %1476, %v1473
  %v1478 = vpop.permute.xlu0 %1477
  %1481 = vset.pattern.permute.xlu0 0
  %1482 = vperm.xlu0 %1481, %v1474
  %v1483 = vpop.permute.xlu0 %1482
  %v1487 = vunpack.c.l.b16 %v1471
  %v1488 = vunpack.c.l.b16 %v1472
  %v1489 = vpack.c.b16 %v1488, %v1487
  %v1491 = vsel %vm502, %v1489, 0
  %1493 = vmatprep.subr.bf16.mxu0 %v1464
  %1494 = vmatpush1.bf16.msra.mxu0 %v1463
  %1495 = vmatprep.subr.bf16.mxu0 %v1466
  %1496 = vmatpush1.bf16.msra.mxu0 %v1465
  %1497 = vmatprep.subr.bf16.mxu0 %v1468
  %1498 = vmatpush1.bf16.msra.mxu0 %v1467
  %1499 = vmatprep.subr.bf16.mxu0 %v1470
  %1500 = vmatpush1.bf16.msra.mxu0 %v1469
  %1501 = vmatprep.subr.bf16.mxu0 0
  %1502 = vmatpush1.bf16.msra.mxu0 0
  %1503 = vmatprep.subr.bf16.mxu0 0
  %1504 = vmatpush1.bf16.msra.mxu0 0
  %1505 = vmatprep.subr.bf16.mxu0 0
  %1506 = vmatpush1.bf16.msra.mxu0 0
  %1507 = vmatprep.subr.bf16.mxu0 0
  %1508 = vmatpush1.bf16.msra.mxu0 0
  %1509 = vmatprep.subr.bf16.mxu0 0
  %1510 = vmatpush1.bf16.msra.mxu0 0
  %1511 = vmatprep.subr.bf16.mxu0 0
  %1512 = vmatpush1.bf16.msra.mxu0 0
  %1513 = vmatprep.subr.bf16.mxu0 0
  %1514 = vmatpush1.bf16.msra.mxu0 0
  %1515 = vmatprep.subr.bf16.mxu0 0
  %1516 = vmatpush1.bf16.msra.mxu0 0
  %1517 = vmatprep.subr.bf16.mxu0 0
  %1518 = vmatpush1.bf16.msra.mxu0 0
  %1519 = vmatprep.subr.bf16.mxu0 0
  %1520 = vmatpush1.bf16.msra.mxu0 0
  %1521 = vmatprep.subr.bf16.mxu0 0
  %1522 = vmatpush1.bf16.msra.mxu0 0
  %1523 = vmatprep.subr.bf16.mxu0 0
  %1524 = vmatpush1.bf16.msra.mxu0 0
  %1525 = vmatprep.mubr.bf16.mxu0 0
  %1526 = vmatmul.mubr.bf16.gmra.mrb[0].mxu0 %v1491
  %v1527 = vpop.f32.mrb[0].mxu0
  %v1528 = vadd.f32 %v1478, %v1527
  %v1529 = vpop.f32.mrb[0].mxu0
  %v1530 = vadd.f32 %v1478, %v1529
  %v1531 = vpop.f32.mrb[0].mxu0
  %v1532 = vadd.f32 %v1483, %v1531
  %v1533 = vpop.f32.mrb[0].mxu0
  %v1534 = vadd.f32 %v1483, %v1533
  %1535 = vdwg.mxu0
  %vm1536 = vcmp.gt.f32.partialorder %v1528, 0.0
  %vm1537 = vcmp.gt.f32.partialorder %v1530, 0.0
  %vm1538 = vcmp.gt.f32.partialorder %v1532, 0.0
  %vm1539 = vcmp.gt.f32.partialorder %v1534, 0.0
  %v1540 = vmul.f32 %v1528, 0.01
  %v1541 = vmul.f32 %v1530, 0.01
  %v1542 = vmul.f32 %v1532, 0.01
  %v1543 = vmul.f32 %v1534, 0.01
  %v1544 = vsel %vm1536, %v1528, %v1540
  %v1545 = vsel %vm1537, %v1530, %v1541
  %v1546 = vsel %vm1538, %v1532, %v1542
  %v1547 = vsel %vm1539, %v1534, %v1543
  %v1548 = vld [vmem:[%s15] sm:$0x1]
  %v1549 = vld [vmem:[#allocation2] sm:$0x1]
  %1551 = vset.pattern.permute.xlu0 0
  %1552 = vperm.xlu0 %1551, %v1549
  %v1553 = vpop.permute.xlu0 %1552
  %v1555 = vlaneseq
  %v1556 = vshrl.u32 %v1555, 7
  %v1557 = vsub.s32 0, %v1556
  %v1558 = vrot.slane %v1553, %v1557
  %vm1559 = vcmask 130048
  %v1561 = vsel %vm1559, %v1548, 0
  %1563 = vmatprep.subr.mxu0 %v1545
  %1564 = vmatpush1.msra.mxu0 %v1544
  %1565 = vmatprep.subr.mxu0 %v1547
  %1566 = vmatpush1.msra.mxu0 %v1546
  %1567 = vmatprep.subr.mxu0 0.0
  %1568 = vmatpush1.msra.mxu0 0.0
  %1569 = vmatprep.subr.mxu0 0.0
  %1570 = vmatpush1.msra.mxu0 0.0
  %1571 = vmatprep.subr.mxu0 0.0
  %1572 = vmatpush1.msra.mxu0 0.0
  %1573 = vmatprep.subr.mxu0 0.0
  %1574 = vmatpush1.msra.mxu0 0.0
  %1575 = vmatprep.subr.mxu0 0.0
  %1576 = vmatpush1.msra.mxu0 0.0
  %1577 = vmatprep.subr.mxu0 0.0
  %1578 = vmatpush1.msra.mxu0 0.0
  %1579 = vmatprep.subr.mxu0 0.0
  %1580 = vmatpush1.msra.mxu0 0.0
  %1581 = vmatprep.subr.mxu0 0.0
  %1582 = vmatpush1.msra.mxu0 0.0
  %1583 = vmatprep.subr.mxu0 0.0
  %1584 = vmatpush1.msra.mxu0 0.0
  %1585 = vmatprep.subr.mxu0 0.0
  %1586 = vmatpush1.msra.mxu0 0.0
  %1587 = vmatprep.subr.mxu0 0.0
  %1588 = vmatpush1.msra.mxu0 0.0
  %1589 = vmatprep.subr.mxu0 0.0
  %1590 = vmatpush1.msra.mxu0 0.0
  %1591 = vmatprep.subr.mxu0 0.0
  %1592 = vmatpush1.msra.mxu0 0.0
  %1593 = vmatprep.subr.mxu0 0.0
  %1594 = vmatpush1.msra.mxu0 0.0
  %1595 = vmatprep.subr.mxu0 0.0
  %1596 = vmatpush1.msra.mxu0 0.0
  %1597 = vmatprep.subr.mxu0 0.0
  %1598 = vmatpush1.msra.mxu0 0.0
  %1599 = vmatprep.subr.mxu0 0.0
  %1600 = vmatpush1.msra.mxu0 0.0
  %1601 = vmatprep.subr.mxu0 0.0
  %1602 = vmatpush1.msra.mxu0 0.0
  %1603 = vmatprep.subr.mxu0 0.0
  %1604 = vmatpush1.msra.mxu0 0.0
  %1605 = vmatprep.subr.mxu0 0.0
  %1606 = vmatpush1.msra.mxu0 0.0
  %1607 = vmatprep.subr.mxu0 0.0
  %1608 = vmatpush1.msra.mxu0 0.0
  %1609 = vmatprep.subr.mxu0 0.0
  %1610 = vmatpush1.msra.mxu0 0.0
  %1611 = vmatprep.subr.mxu0 0.0
  %1612 = vmatpush1.msra.mxu0 0.0
  %1613 = vmatprep.subr.mxu0 0.0
  %1614 = vmatpush1.msra.mxu0 0.0
  %1615 = vmatprep.subr.mxu0 0.0
  %1616 = vmatpush1.msra.mxu0 0.0
  %1617 = vmatprep.subr.mxu0 0.0
  %1618 = vmatpush1.msra.mxu0 0.0
  %1619 = vmatprep.subr.mxu0 0.0
  %1620 = vmatpush1.msra.mxu0 0.0
  %1621 = vmatprep.subr.mxu0 0.0
  %1622 = vmatpush1.msra.mxu0 0.0
  %1623 = vmatprep.subr.mxu0 0.0
  %1624 = vmatpush1.msra.mxu0 0.0
  %1625 = vmatprep.subr.mxu0 0.0
  %1626 = vmatpush1.msra.mxu0 0.0
  %1627 = vmatprep.mubr.f32.mxu0 0.0
  %1628 = vmatmul.mubr.f32.gmra.mrb[0].mxu0 %v1561
  %v1629 = vpop.f32.mrb[0].mxu0
  %v1630 = vadd.f32 %v1558, %v1629
  %v1631 = vpop.f32.mrb[0].mxu0
  %v1632 = vadd.f32 %v1558, %v1631
  %1633 = vdwg.mxu0
  %v1634 = vsub.f32 0.0, %v1630
  %v1635 = vsub.f32 0.0, %v1632
  %v1636 = vmul.f32 %v1634, 1.442695
  %v1637 = vpow.pop %v1636
  %v1638 = vmul.f32 %v1635, 1.442695
  %v1639 = vpow.pop %v1638
  %v1640 = vadd.f32 %v1637, 1.0
  %v1641 = vadd.f32 %v1639, 1.0
  %v1642 = vrcp.pop %v1640
  %v1643 = vrcp.pop %v1641
  %v1646 = vcombine.low %v1642, %v1643
  %v1648 = vunpack.c.l.s4 1966171168
  %v1649 = vunpack.c.0.s8 %v1648
  %v1650 = vlaneseq
  %v1651 = vshrl.u32 %v1650, 7
  %v1652 = vsub.s32 %v1649, %v1651
  %v1653 = vrot.slane %v1646, %v1652
  %v1655 = vunpack.c.l.s4 1966171168
  %v1656 = vunpack.c.0.s8 %v1655
  %v1657 = vlaneseq
  %v1658 = vshrl.u32 %v1657, 7
  %v1659 = vsub.s32 %v1656, %v1658
  %v1660 = vrot.slane %v1653, %v1659
  %v1662 = vlaneseq
  %vm1663 = vcmp.ge.s32.totalorder %v1662, 0
  %vm1664 = vcmp.lt.s32.totalorder %v1662, 256
  %vm1665 = vmand %vm1663, %vm1664
  %1666 = vst.msk [vmem:[%s17] sm:$0x3] %vm1665, %v1660
  // Predicated region
  $region70: #{flash_forward.1} parent=0 // pred_check
    _
  $region71: #{flash_forward.1} parent=0 // pred_check_branch
    %1668 = sbr.rel (0) target = $region73
  $region72: #{flash_forward.1} parent=0 // pred_region
    _
  $region73: #{flash_forward.1} parent=0 // pred_fallthru
    _
  // Predicated region
  $region74: #{flash_forward.1} parent=0 // pred_check
    _
  $region75: #{flash_forward.1} parent=0 // pred_check_branch
    %1670 = sbr.rel (0) target = $region77
  $region76: #{flash_forward.1} parent=0 // pred_region
    _
  $region77: #{flash_forward.1} parent=0 // pred_fallthru
    _

</llo_original>
